<compile_context>
chip_gen: v5e
topology: v5e:2x2
jax: 0.10.0
libtpu: 0.0.40
codegen_flags: <defaults>
</compile_context>

<pallas_src>
import math
import functools

import jax
import jax.numpy as jnp
from jax.experimental import pallas as pl
from jax.experimental.pallas import tpu as pltpu


# ----------------------------- in-kernel helpers -----------------------------

def _layernorm(x, g, b, eps):
    mu = jnp.mean(x, axis=-1, keepdims=True)
    xc = x - mu
    var = jnp.mean(xc * xc, axis=-1, keepdims=True)
    return xc * jax.lax.rsqrt(var + eps) * g + b


def _gelu_tanh(x):
    # TODO(synk): config.hidden_act is taken as the tanh-GELU callable; the
    #             erf-based ACT2FN['gelu'] differs at ~1e-3.
    c = math.sqrt(2.0 / math.pi)
    return 0.5 * x * (1.0 + jnp.tanh(c * (x + 0.044715 * x * x * x)))


# ------------------------------- Pallas kernel -------------------------------

def bert_layer_kernel(x_ref, mask_ref,
                      wq_ref, bq_ref, wk_ref, bk_ref, wv_ref, bv_ref,
                      wo_ref, bo_ref, ln1g_ref, ln1b_ref,
                      wi_ref, bi_ref, wo2_ref, bo2_ref, ln2g_ref, ln2b_ref,
                      out_ref,
                      kh_ref, vh_ref,
                      *, num_heads, head_dim, tq, eps, compute_dtype):
    """One full BertLayer for a (TQ, H) query tile of one batch element.

    x_ref holds the full (S, H) sequence of the current batch element (its
    block index is constant across query tiles, so it is DMA'd once per b).
    kh_ref / vh_ref are persistent VMEM scratch (nh, S, hd) filled at qi == 0.
    """
    f32 = jnp.float32
    cd = compute_dtype
    qi = pl.program_id(1)

    # --- K/V projections: computed ONCE per batch element, head-major layout.
    @pl.when(qi == 0)
    def _fill_kv():
        x_all = x_ref[...].astype(cd)                               # (S, H)
        k = jnp.dot(x_all, wk_ref[...], preferred_element_type=f32) + bk_ref[...]
        v = jnp.dot(x_all, wv_ref[...], preferred_element_type=f32) + bv_ref[...]
        for h in range(num_heads):                                  # amortized over n_qt tiles
            sl = slice(h * head_dim, (h + 1) * head_dim)
            kh_ref[h] = k[:, sl].astype(cd)
            vh_ref[h] = v[:, sl].astype(cd)

    # --- per-query-tile work (residual tile sliced from the resident block).
    q_start = pl.multiple_of(qi * tq, tq)
    xq = x_ref[pl.ds(q_start, tq), :].astype(f32)                   # (TQ, H)
    mask = mask_ref[...].astype(f32)                                # (1, S)

    # Q projection (1/sqrt(head_dim) already folded into wq / bq by wrapper).
    q = jnp.dot(xq.astype(cd), wq_ref[...], preferred_element_type=f32) + bq_ref[...]
    qh = jnp.stack(
        [q[:, h * head_dim:(h + 1) * head_dim] for h in range(num_heads)],
        axis=0).astype(cd)                                          # (nh, TQ, hd)

    # --- attention scores + softmax, batched over heads (leading batch dim).
    # TODO(synk): for S >= 1024 convert to an online-softmax loop over K/V
    #             chunks to bound the (nh, TQ, S) score scratch (v7x VMEM).
    s = jnp.einsum('hqd,hkd->hqk', qh, kh_ref[...],
                   preferred_element_type=f32)                      # (nh, TQ, S)
    s = s + mask[None, :, :]
    s = s - jnp.max(s, axis=-1, keepdims=True)
    p = jnp.exp(s)
    p = p * pl.reciprocal(jnp.sum(p, axis=-1, keepdims=True), approx=True)
    # NOTE: attention_probs dropout and head_mask are identity at inference.

    ctx = jnp.einsum('hqk,hkd->hqd', p.astype(cd), vh_ref[...],
                     preferred_element_type=f32)                    # (nh, TQ, hd)
    ctx2d = jnp.concatenate([ctx[h] for h in range(num_heads)], axis=-1)  # (TQ, H)

    # --- BertSelfOutput: output projection + residual + LayerNorm (post-norm).
    attn = jnp.dot(ctx2d.astype(cd), wo_ref[...],
                   preferred_element_type=f32) + bo_ref[...]
    h1 = _layernorm(attn + xq, ln1g_ref[...], ln1b_ref[...], eps)

    # --- BertIntermediate + BertOutput.
    # TODO(synk): for BERT-large (I=4096) chunk the intermediate dim and
    #             accumulate into a (TQ, H) f32 accumulator to cut VMEM/vregs.
    inter = _gelu_tanh(
        jnp.dot(h1.astype(cd), wi_ref[...], preferred_element_type=f32) + bi_ref[...])
    o = jnp.dot(inter.astype(cd), wo2_ref[...],
                preferred_element_type=f32) + bo2_ref[...]
    out_ref[...] = _layernorm(o + h1, ln2g_ref[...], ln2b_ref[...], eps
                              ).astype(out_ref.dtype)


# ---------------------------------- wrapper ----------------------------------

def _tpu_vmem_bytes(default=128 * 1024 * 1024):
    try:
        return int(pltpu.get_tpu_info().vmem_capacity_bytes)
    except Exception:
        return default


def _pick_query_tile(S, vmem_bytes):
    # v7x (64 MiB/TC VMEM): cap TQ at 128; v5e/v6e (128 MiB): allow 256.
    max_tq = 256 if vmem_bytes >= 100 * (1 << 20) else 128
    for cand in (256, 128, 64, 32, 16, 8):
        if cand <= max_tq and S % cand == 0:
            return cand
    return S


def bert_layer(x, mask3d, params, *, num_heads, eps, compute_dtype=jnp.bfloat16):
    B, S, H = x.shape
    I = params["wi"].shape[1]
    assert H % num_heads == 0
    head_dim = H // num_heads

    vmem_bytes = _tpu_vmem_bytes()
    tq = _pick_query_tile(S, vmem_bytes)
    n_qt = S // tq
    vmem_limit = int(min(vmem_bytes * 3 // 4, 100 * (1 << 20)))

    kern = functools.partial(bert_layer_kernel, num_heads=num_heads,
                             head_dim=head_dim, tq=tq, eps=eps,
                             compute_dtype=compute_dtype)

    const = lambda b, qi: (0, 0)              # weights: VMEM-resident across grid
    # TODO(synk): these constant-index weight blocks are still double-buffered
    #             by the default pipeline; single-buffering them
    #             (pipeline_mode=pl.Buffered(1)) would halve resident weight
    #             VMEM on v7x once that path is validated on the target JAX.
    w_hh = pl.BlockSpec((H, H), const)
    w_hi = pl.BlockSpec((H, I), const)
    w_ih = pl.BlockSpec((I, H), const)
    vec_h = pl.BlockSpec((1, H), const)
    vec_i = pl.BlockSpec((1, I), const)

    in_specs = [
        pl.BlockSpec((None, S, H), lambda b, qi: (b, 0, 0)),   # full sequence (Q tile sliced in-kernel)
        pl.BlockSpec((None, 1, S), lambda b, qi: (b, 0, 0)),   # additive attention mask
        w_hh, vec_h,   # wq, bq  (scaled by 1/sqrt(head_dim))
        w_hh, vec_h,   # wk, bk
        w_hh, vec_h,   # wv, bv
        w_hh, vec_h,   # wo, bo
        vec_h, vec_h,  # ln1 gamma, beta
        w_hi, vec_i,   # wi, bi
        w_ih, vec_h,   # wo2, bo2
        vec_h, vec_h,  # ln2 gamma, beta
    ]
    out_specs = pl.BlockSpec((None, tq, H), lambda b, qi: (b, qi, 0))

    scratch_shapes = [
        pltpu.VMEM((num_heads, S, head_dim), compute_dtype),   # K, head-major, per-b
        pltpu.VMEM((num_heads, S, head_dim), compute_dtype),   # V, head-major, per-b
    ]

    return pl.pallas_call(
        kern,
        grid=(B, n_qt),
        in_specs=in_specs,
        out_specs=out_specs,
        out_shape=jax.ShapeDtypeStruct((B, S, H), x.dtype),
        scratch_shapes=scratch_shapes,
        compiler_params=pltpu.CompilerParams(
            dimension_semantics=("parallel", "arbitrary"),
            vmem_limit_bytes=vmem_limit),
    )(x, mask3d,
      params["wq"], params["bq"], params["wk"], params["bk"],
      params["wv"], params["bv"], params["wo"], params["bo"],
      params["ln1g"], params["ln1b"],
      params["wi"], params["bi"], params["wo2"], params["bo2"],
      params["ln2g"], params["ln2b"])


def bert_encoder(hidden_states, attention_mask, layer_params, *, num_heads, eps,
                 compute_dtype=jnp.bfloat16):
    # attention_mask: (B, 1, 1, S) additive mask, as produced by BertModel.
    B = attention_mask.shape[0]
    S = attention_mask.shape[-1]
    mask3d = attention_mask.reshape(B, 1, S).astype(jnp.float32)
    # TODO(synk): cross-layer weight prefetch (cross-pallas_call DMA futures,
    #             P10) not implemented; layers run as sequential pallas_calls,
    #             so each layer's first tiles see its weight DMA exposed.
    for params in layer_params:
        hidden_states = bert_layer(hidden_states, mask3d, params,
                                   num_heads=num_heads, eps=eps,
                                   compute_dtype=compute_dtype)
    # post-norm config (pre_norm=False); output_hidden_states/attentions=False.
    return (hidden_states,)


# ----------------------------- parameter creation -----------------------------

def init_layer_params(key, hidden, intermediate):
    """Torch-layout params: nn.Linear weights are (out_features, in_features)."""
    ks = jax.random.split(key, 6)
    std = 0.02

    def lin(k, out_f, in_f):
        return jax.random.normal(k, (out_f, in_f), jnp.float32) * std

    return {
        "wq": lin(ks[0], hidden, hidden), "bq": jnp.zeros((hidden,), jnp.float32),
        "wk": lin(ks[1], hidden, hidden), "bk": jnp.zeros((hidden,), jnp.float32),
        "wv": lin(ks[2], hidden, hidden), "bv": jnp.zeros((hidden,), jnp.float32),
        "wo": lin(ks[3], hidden, hidden), "bo": jnp.zeros((hidden,), jnp.float32),
        "ln1g": jnp.ones((hidden,), jnp.float32),
        "ln1b": jnp.zeros((hidden,), jnp.float32),
        "wi": lin(ks[4], intermediate, hidden),
        "bi": jnp.zeros((intermediate,), jnp.float32),
        "wo2": lin(ks[5], hidden, intermediate),
        "bo2": jnp.zeros((hidden,), jnp.float32),
        "ln2g": jnp.ones((hidden,), jnp.float32),
        "ln2b": jnp.zeros((hidden,), jnp.float32),
    }


def prepare_layer_params(raw, *, num_heads, compute_dtype=jnp.bfloat16):
    """Convert torch-layout params to kernel layout.

    - Linear weights (out, in) -> (in, out) so the kernel computes x @ W + b.
    - 1/sqrt(head_dim) folded into the query projection (weight AND bias).
    - Matmul weights cast to `compute_dtype` (bf16 default: halves weight DMA
      and resident VMEM on all generations, f32 accumulation kept);
      biases / LayerNorm params stay f32 (elementwise path stays f32 on v5e).
    """
    hidden = raw["wq"].shape[0]
    head_dim = hidden // num_heads
    gamma = math.sqrt(head_dim)

    def w(t):
        return t.T.astype(compute_dtype)

    def vec(t):
        return t.reshape(1, -1).astype(jnp.float32)

    return {
        "wq": (raw["wq"] / gamma).T.astype(compute_dtype),
        "bq": vec(raw["bq"] / gamma),
        "wk": w(raw["wk"]), "bk": vec(raw["bk"]),
        "wv": w(raw["wv"]), "bv": vec(raw["bv"]),
        "wo": w(raw["wo"]), "bo": vec(raw["bo"]),
        "ln1g": vec(raw["ln1g"]), "ln1b": vec(raw["ln1b"]),
        "wi": w(raw["wi"]), "bi": vec(raw["bi"]),
        "wo2": w(raw["wo2"]), "bo2": vec(raw["bo2"]),
        "ln2g": vec(raw["ln2g"]), "ln2b": vec(raw["ln2b"]),
    }


# ------------------------------------ main ------------------------------------

if __name__ == "__main__":
    B, S, H = 2, 8, 32
    NUM_HEADS = 4
    INTERMEDIATE = 64
    NUM_LAYERS = 2
    EPS = 1e-12

    key = jax.random.PRNGKey(0)
    k_x, k_p = jax.random.split(key)

    hidden_states = jax.random.normal(k_x, (B, S, H), jnp.float32)

    # attention mask: batch 0 fully visible, batch 1 has last 2 tokens masked.
    valid = jnp.ones((B, S), jnp.float32).at[1, -2:].set(0.0)
    attention_mask = ((1.0 - valid) * -10000.0)[:, None, None, :]   # (B,1,1,S)

    # bf16 matmul operands / resident weights (f32 accumulation, f32
    # LayerNorm/GELU/softmax statistics) — the recommended default.
    compute_dtype = jnp.bfloat16
    layer_params = [
        prepare_layer_params(
            init_layer_params(jax.random.fold_in(k_p, i), H, INTERMEDIATE),
            num_heads=NUM_HEADS, compute_dtype=compute_dtype)
        for i in range(NUM_LAYERS)
    ]

    outputs = bert_encoder(hidden_states, attention_mask, layer_params,
                           num_heads=NUM_HEADS, eps=EPS,
                           compute_dtype=compute_dtype)
    out = jax.block_until_ready(outputs[0])
    assert out.shape == (B, S, H)
    assert bool(jnp.all(jnp.isfinite(out)))
    print("KERNEL_OK")
</pallas_src>

<mosaic_0001>
module attributes {stable_mosaic.version = 11 : i64} {
  func.func @bert_layer_kernel(%arg0: i32, %arg1: i32, %arg2: memref<1x8x32xf32, #tpu.memory_space<vmem>>, %arg3: memref<1x1x8xf32, #tpu.memory_space<vmem>>, %arg4: memref<32x32xbf16, #tpu.memory_space<vmem>>, %arg5: memref<1x32xf32, #tpu.memory_space<vmem>>, %arg6: memref<32x32xbf16, #tpu.memory_space<vmem>>, %arg7: memref<1x32xf32, #tpu.memory_space<vmem>>, %arg8: memref<32x32xbf16, #tpu.memory_space<vmem>>, %arg9: memref<1x32xf32, #tpu.memory_space<vmem>>, %arg10: memref<32x32xbf16, #tpu.memory_space<vmem>>, %arg11: memref<1x32xf32, #tpu.memory_space<vmem>>, %arg12: memref<1x32xf32, #tpu.memory_space<vmem>>, %arg13: memref<1x32xf32, #tpu.memory_space<vmem>>, %arg14: memref<32x64xbf16, #tpu.memory_space<vmem>>, %arg15: memref<1x64xf32, #tpu.memory_space<vmem>>, %arg16: memref<64x32xbf16, #tpu.memory_space<vmem>>, %arg17: memref<1x32xf32, #tpu.memory_space<vmem>>, %arg18: memref<1x32xf32, #tpu.memory_space<vmem>>, %arg19: memref<1x32xf32, #tpu.memory_space<vmem>>, %arg20: memref<1x8x32xf32, #tpu.memory_space<vmem>>, %arg21: memref<4x8x8xbf16, #tpu.memory_space<vmem>>, %arg22: memref<4x8x8xbf16, #tpu.memory_space<vmem>>) attributes {dimension_semantics = [#tpu.dimension_semantics<parallel>, #tpu.dimension_semantics<arbitrary>], iteration_bounds = array<i64: 2, 1>, scalar_prefetch = 0 : i64, scratch_operands = 2 : i64, tpu.core_type = #tpu.core_type<tc>, window_params = [{transform_indices = @transform_0, window_bounds = array<i64: 1, 8, 32>}, {transform_indices = @transform_1, window_bounds = array<i64: 1, 1, 8>}, {pipeline_mode = #tpu.pipeline_mode<synchronous>, transform_indices = @transform_2, window_bounds = array<i64: 32, 32>}, {pipeline_mode = #tpu.pipeline_mode<synchronous>, transform_indices = @transform_3, window_bounds = array<i64: 1, 32>}, {pipeline_mode = #tpu.pipeline_mode<synchronous>, transform_indices = @transform_4, window_bounds = array<i64: 32, 32>}, {pipeline_mode = #tpu.pipeline_mode<synchronous>, transform_indices = @transform_5, window_bounds = array<i64: 1, 32>}, {pipeline_mode = #tpu.pipeline_mode<synchronous>, transform_indices = @transform_6, window_bounds = array<i64: 32, 32>}, {pipeline_mode = #tpu.pipeline_mode<synchronous>, transform_indices = @transform_7, window_bounds = array<i64: 1, 32>}, {pipeline_mode = #tpu.pipeline_mode<synchronous>, transform_indices = @transform_8, window_bounds = array<i64: 32, 32>}, {pipeline_mode = #tpu.pipeline_mode<synchronous>, transform_indices = @transform_9, window_bounds = array<i64: 1, 32>}, {pipeline_mode = #tpu.pipeline_mode<synchronous>, transform_indices = @transform_10, window_bounds = array<i64: 1, 32>}, {pipeline_mode = #tpu.pipeline_mode<synchronous>, transform_indices = @transform_11, window_bounds = array<i64: 1, 32>}, {pipeline_mode = #tpu.pipeline_mode<synchronous>, transform_indices = @transform_12, window_bounds = array<i64: 32, 64>}, {pipeline_mode = #tpu.pipeline_mode<synchronous>, transform_indices = @transform_13, window_bounds = array<i64: 1, 64>}, {pipeline_mode = #tpu.pipeline_mode<synchronous>, transform_indices = @transform_14, window_bounds = array<i64: 64, 32>}, {pipeline_mode = #tpu.pipeline_mode<synchronous>, transform_indices = @transform_15, window_bounds = array<i64: 1, 32>}, {pipeline_mode = #tpu.pipeline_mode<synchronous>, transform_indices = @transform_16, window_bounds = array<i64: 1, 32>}, {pipeline_mode = #tpu.pipeline_mode<synchronous>, transform_indices = @transform_17, window_bounds = array<i64: 1, 32>}, {transform_indices = @transform_18, window_bounds = array<i64: 1, 8, 32>}]} {
    %c0_i32 = arith.constant 0 : i32
    %0 = arith.cmpi eq, %arg1, %c0_i32 : i32
    %1 = arith.extui %0 : i1 to i32
    %c0_i32_0 = arith.constant 0 : i32
    %2 = arith.cmpi ne, %1, %c0_i32_0 : i32
    scf.if %2 {
      %c0_59 = arith.constant 0 : index
      %c0_60 = arith.constant 0 : index
      %c0_61 = arith.constant 0 : index
      %133 = vector.load %arg2[%c0_59, %c0_60, %c0_61] : memref<1x8x32xf32, #tpu.memory_space<vmem>>, vector<1x8x32xf32>
      %134 = vector.shape_cast %133 : vector<1x8x32xf32> to vector<8x32xf32>
      %135 = arith.truncf %134 : vector<8x32xf32> to vector<8x32xbf16>
      %c0_62 = arith.constant 0 : index
      %c0_63 = arith.constant 0 : index
      %136 = vector.load %arg6[%c0_62, %c0_63] : memref<32x32xbf16, #tpu.memory_space<vmem>>, vector<32x32xbf16>
      %cst_64 = arith.constant dense<0.000000e+00> : vector<8x32xf32>
      %137 = tpu.matmul %135, %136, %cst_64 {dimension_numbers = #tpu.dot_dimension_numbers<[1], [0], [0], [1], [0, 0, 1, 1], [], []>} : vector<8x32xbf16>, vector<32x32xbf16>, vector<8x32xf32> -> vector<8x32xf32>
      %c0_65 = arith.constant 0 : index
      %c0_66 = arith.constant 0 : index
      %138 = vector.load %arg7[%c0_65, %c0_66] : memref<1x32xf32, #tpu.memory_space<vmem>>, vector<1x32xf32>
      %139 = vector.broadcast %138 : vector<1x32xf32> to vector<8x32xf32>
      %140 = arith.addf %137, %139 : vector<8x32xf32>
      %c0_67 = arith.constant 0 : index
      %c0_68 = arith.constant 0 : index
      %141 = vector.load %arg8[%c0_67, %c0_68] : memref<32x32xbf16, #tpu.memory_space<vmem>>, vector<32x32xbf16>
      %cst_69 = arith.constant dense<0.000000e+00> : vector<8x32xf32>
      %142 = tpu.matmul %135, %141, %cst_69 {dimension_numbers = #tpu.dot_dimension_numbers<[1], [0], [0], [1], [0, 0, 1, 1], [], []>} : vector<8x32xbf16>, vector<32x32xbf16>, vector<8x32xf32> -> vector<8x32xf32>
      %c0_70 = arith.constant 0 : index
      %c0_71 = arith.constant 0 : index
      %143 = vector.load %arg9[%c0_70, %c0_71] : memref<1x32xf32, #tpu.memory_space<vmem>>, vector<1x32xf32>
      %144 = vector.broadcast %143 : vector<1x32xf32> to vector<8x32xf32>
      %145 = arith.addf %142, %144 : vector<8x32xf32>
      %146 = vector.extract_strided_slice %140 {offsets = [0, 0], sizes = [8, 8], strides = [1, 1]} : vector<8x32xf32> to vector<8x8xf32>
      %147 = arith.truncf %146 : vector<8x8xf32> to vector<8x8xbf16>
      %c0_72 = arith.constant 0 : index
      %c0_73 = arith.constant 0 : index
      %c0_74 = arith.constant 0 : index
      %148 = vector.load %arg21[%c0_72, %c0_73, %c0_74] : memref<4x8x8xbf16, #tpu.memory_space<vmem>>, vector<1x8x8xbf16>
      %149 = vector.shape_cast %148 : vector<1x8x8xbf16> to vector<8x8xbf16>
      %150 = vector.shape_cast %147 : vector<8x8xbf16> to vector<1x8x8xbf16>
      tpu.vector_store %arg21[%c0_72, %c0_73, %c0_74], %150 {strides = array<i32>} : memref<4x8x8xbf16, #tpu.memory_space<vmem>>, vector<1x8x8xbf16>,
      %151 = vector.extract_strided_slice %145 {offsets = [0, 0], sizes = [8, 8], strides = [1, 1]} : vector<8x32xf32> to vector<8x8xf32>
      %152 = arith.truncf %151 : vector<8x8xf32> to vector<8x8xbf16>
      %c0_75 = arith.constant 0 : index
      %c0_76 = arith.constant 0 : index
      %c0_77 = arith.constant 0 : index
      %153 = vector.load %arg22[%c0_75, %c0_76, %c0_77] : memref<4x8x8xbf16, #tpu.memory_space<vmem>>, vector<1x8x8xbf16>
      %154 = vector.shape_cast %153 : vector<1x8x8xbf16> to vector<8x8xbf16>
      %155 = vector.shape_cast %152 : vector<8x8xbf16> to vector<1x8x8xbf16>
      tpu.vector_store %arg22[%c0_75, %c0_76, %c0_77], %155 {strides = array<i32>} : memref<4x8x8xbf16, #tpu.memory_space<vmem>>, vector<1x8x8xbf16>,
      %156 = vector.extract_strided_slice %140 {offsets = [0, 8], sizes = [8, 8], strides = [1, 1]} : vector<8x32xf32> to vector<8x8xf32>
      %157 = arith.truncf %156 : vector<8x8xf32> to vector<8x8xbf16>
      %c1 = arith.constant 1 : index
      %c0_78 = arith.constant 0 : index
      %c0_79 = arith.constant 0 : index
      %158 = vector.load %arg21[%c1, %c0_78, %c0_79] : memref<4x8x8xbf16, #tpu.memory_space<vmem>>, vector<1x8x8xbf16>
      %159 = vector.shape_cast %158 : vector<1x8x8xbf16> to vector<8x8xbf16>
      %160 = vector.shape_cast %157 : vector<8x8xbf16> to vector<1x8x8xbf16>
      tpu.vector_store %arg21[%c1, %c0_78, %c0_79], %160 {strides = array<i32>} : memref<4x8x8xbf16, #tpu.memory_space<vmem>>, vector<1x8x8xbf16>,
      %161 = vector.extract_strided_slice %145 {offsets = [0, 8], sizes = [8, 8], strides = [1, 1]} : vector<8x32xf32> to vector<8x8xf32>
      %162 = arith.truncf %161 : vector<8x8xf32> to vector<8x8xbf16>
      %c1_80 = arith.constant 1 : index
      %c0_81 = arith.constant 0 : index
      %c0_82 = arith.constant 0 : index
      %163 = vector.load %arg22[%c1_80, %c0_81, %c0_82] : memref<4x8x8xbf16, #tpu.memory_space<vmem>>, vector<1x8x8xbf16>
      %164 = vector.shape_cast %163 : vector<1x8x8xbf16> to vector<8x8xbf16>
      %165 = vector.shape_cast %162 : vector<8x8xbf16> to vector<1x8x8xbf16>
      tpu.vector_store %arg22[%c1_80, %c0_81, %c0_82], %165 {strides = array<i32>} : memref<4x8x8xbf16, #tpu.memory_space<vmem>>, vector<1x8x8xbf16>,
      %166 = vector.extract_strided_slice %140 {offsets = [0, 16], sizes = [8, 8], strides = [1, 1]} : vector<8x32xf32> to vector<8x8xf32>
      %167 = arith.truncf %166 : vector<8x8xf32> to vector<8x8xbf16>
      %c2 = arith.constant 2 : index
      %c0_83 = arith.constant 0 : index
      %c0_84 = arith.constant 0 : index
      %168 = vector.load %arg21[%c2, %c0_83, %c0_84] : memref<4x8x8xbf16, #tpu.memory_space<vmem>>, vector<1x8x8xbf16>
      %169 = vector.shape_cast %168 : vector<1x8x8xbf16> to vector<8x8xbf16>
      %170 = vector.shape_cast %167 : vector<8x8xbf16> to vector<1x8x8xbf16>
      tpu.vector_store %arg21[%c2, %c0_83, %c0_84], %170 {strides = array<i32>} : memref<4x8x8xbf16, #tpu.memory_space<vmem>>, vector<1x8x8xbf16>,
      %171 = vector.extract_strided_slice %145 {offsets = [0, 16], sizes = [8, 8], strides = [1, 1]} : vector<8x32xf32> to vector<8x8xf32>
      %172 = arith.truncf %171 : vector<8x8xf32> to vector<8x8xbf16>
      %c2_85 = arith.constant 2 : index
      %c0_86 = arith.constant 0 : index
      %c0_87 = arith.constant 0 : index
      %173 = vector.load %arg22[%c2_85, %c0_86, %c0_87] : memref<4x8x8xbf16, #tpu.memory_space<vmem>>, vector<1x8x8xbf16>
      %174 = vector.shape_cast %173 : vector<1x8x8xbf16> to vector<8x8xbf16>
      %175 = vector.shape_cast %172 : vector<8x8xbf16> to vector<1x8x8xbf16>
      tpu.vector_store %arg22[%c2_85, %c0_86, %c0_87], %175 {strides = array<i32>} : memref<4x8x8xbf16, #tpu.memory_space<vmem>>, vector<1x8x8xbf16>,
      %176 = vector.extract_strided_slice %140 {offsets = [0, 24], sizes = [8, 8], strides = [1, 1]} : vector<8x32xf32> to vector<8x8xf32>
      %177 = arith.truncf %176 : vector<8x8xf32> to vector<8x8xbf16>
      %c3 = arith.constant 3 : index
      %c0_88 = arith.constant 0 : index
      %c0_89 = arith.constant 0 : index
      %178 = vector.load %arg21[%c3, %c0_88, %c0_89] : memref<4x8x8xbf16, #tpu.memory_space<vmem>>, vector<1x8x8xbf16>
      %179 = vector.shape_cast %178 : vector<1x8x8xbf16> to vector<8x8xbf16>
      %180 = vector.shape_cast %177 : vector<8x8xbf16> to vector<1x8x8xbf16>
      tpu.vector_store %arg21[%c3, %c0_88, %c0_89], %180 {strides = array<i32>} : memref<4x8x8xbf16, #tpu.memory_space<vmem>>, vector<1x8x8xbf16>,
      %181 = vector.extract_strided_slice %145 {offsets = [0, 24], sizes = [8, 8], strides = [1, 1]} : vector<8x32xf32> to vector<8x8xf32>
      %182 = arith.truncf %181 : vector<8x8xf32> to vector<8x8xbf16>
      %c3_90 = arith.constant 3 : index
      %c0_91 = arith.constant 0 : index
      %c0_92 = arith.constant 0 : index
      %183 = vector.load %arg22[%c3_90, %c0_91, %c0_92] : memref<4x8x8xbf16, #tpu.memory_space<vmem>>, vector<1x8x8xbf16>
      %184 = vector.shape_cast %183 : vector<1x8x8xbf16> to vector<8x8xbf16>
      %185 = vector.shape_cast %182 : vector<8x8xbf16> to vector<1x8x8xbf16>
      tpu.vector_store %arg22[%c3_90, %c0_91, %c0_92], %185 {strides = array<i32>} : memref<4x8x8xbf16, #tpu.memory_space<vmem>>, vector<1x8x8xbf16>,
    } else {
    }
    %c8_i32 = arith.constant 8 : i32
    %3 = arith.muli %arg1, %c8_i32 : i32
    %4 = tpu.assume_multiple %3, 8 : i32
    %c0 = arith.constant 0 : index
    %5 = arith.index_cast %4 : i32 to index
    %c0_1 = arith.constant 0 : index
    %6 = vector.load %arg2[%c0, %5, %c0_1] : memref<1x8x32xf32, #tpu.memory_space<vmem>>, vector<1x8x32xf32>
    %7 = vector.shape_cast %6 : vector<1x8x32xf32> to vector<8x32xf32>
    %c0_2 = arith.constant 0 : index
    %c0_3 = arith.constant 0 : index
    %c0_4 = arith.constant 0 : index
    %8 = vector.load %arg3[%c0_2, %c0_3, %c0_4] : memref<1x1x8xf32, #tpu.memory_space<vmem>>, vector<1x1x8xf32>
    %9 = vector.shape_cast %8 : vector<1x1x8xf32> to vector<1x8xf32>
    %10 = arith.truncf %7 : vector<8x32xf32> to vector<8x32xbf16>
    %c0_5 = arith.constant 0 : index
    %c0_6 = arith.constant 0 : index
    %11 = vector.load %arg4[%c0_5, %c0_6] : memref<32x32xbf16, #tpu.memory_space<vmem>>, vector<32x32xbf16>
    %cst = arith.constant dense<0.000000e+00> : vector<8x32xf32>
    %12 = tpu.matmul %10, %11, %cst {dimension_numbers = #tpu.dot_dimension_numbers<[1], [0], [0], [1], [0, 0, 1, 1], [], []>} : vector<8x32xbf16>, vector<32x32xbf16>, vector<8x32xf32> -> vector<8x32xf32>
    %c0_7 = arith.constant 0 : index
    %c0_8 = arith.constant 0 : index
    %13 = vector.load %arg5[%c0_7, %c0_8] : memref<1x32xf32, #tpu.memory_space<vmem>>, vector<1x32xf32>
    %14 = vector.broadcast %13 : vector<1x32xf32> to vector<8x32xf32>
    %15 = arith.addf %12, %14 : vector<8x32xf32>
    %16 = vector.extract_strided_slice %15 {offsets = [0, 0], sizes = [8, 8], strides = [1, 1]} : vector<8x32xf32> to vector<8x8xf32>
    %17 = vector.extract_strided_slice %15 {offsets = [0, 8], sizes = [8, 8], strides = [1, 1]} : vector<8x32xf32> to vector<8x8xf32>
    %18 = vector.extract_strided_slice %15 {offsets = [0, 16], sizes = [8, 8], strides = [1, 1]} : vector<8x32xf32> to vector<8x8xf32>
    %19 = vector.extract_strided_slice %15 {offsets = [0, 24], sizes = [8, 8], strides = [1, 1]} : vector<8x32xf32> to vector<8x8xf32>
    %20 = vector.shape_cast %16 : vector<8x8xf32> to vector<1x8x8xf32>
    %21 = vector.shape_cast %17 : vector<8x8xf32> to vector<1x8x8xf32>
    %22 = vector.shape_cast %18 : vector<8x8xf32> to vector<1x8x8xf32>
    %23 = vector.shape_cast %19 : vector<8x8xf32> to vector<1x8x8xf32>
    %24 = tpu.concatenate %20, %21, %22, %23 in 0 : vector<1x8x8xf32>, vector<1x8x8xf32>, vector<1x8x8xf32>, vector<1x8x8xf32> -> vector<4x8x8xf32>
    %25 = arith.truncf %24 : vector<4x8x8xf32> to vector<4x8x8xbf16>
    %c0_9 = arith.constant 0 : index
    %c0_10 = arith.constant 0 : index
    %c0_11 = arith.constant 0 : index
    %26 = vector.load %arg21[%c0_9, %c0_10, %c0_11] : memref<4x8x8xbf16, #tpu.memory_space<vmem>>, vector<4x8x8xbf16>
    "tpu.trace_start"() <{level = 10 : i32, message = "hqd,hkd->hqk"}> : () -> ()
    %cst_12 = arith.constant dense<0.000000e+00> : vector<4x8x8xf32>
    %27 = tpu.matmul %25, %26, %cst_12 {dimension_numbers = #tpu.dot_dimension_numbers<[2], [2], [1], [1], [0, 0, 0, 1, 1, 1], [0], [0]>} : vector<4x8x8xbf16>, vector<4x8x8xbf16>, vector<4x8x8xf32> -> vector<4x8x8xf32>
    "tpu.trace_stop"() : () -> ()
    %28 = vector.shape_cast %9 : vector<1x8xf32> to vector<1x1x8xf32>
    %29 = vector.broadcast %28 : vector<1x1x8xf32> to vector<4x8x8xf32>
    %30 = arith.addf %27, %29 : vector<4x8x8xf32>
    %cst_13 = arith.constant dense<0xFF800000> : vector<4x8xf32>
    %31 = vector.multi_reduction <maximumf>, %30, %cst_13 [2] : vector<4x8x8xf32> to vector<4x8xf32>
    %32 = vector.shape_cast %31 : vector<4x8xf32> to vector<4x8x1xf32>
    %33 = vector.broadcast %32 : vector<4x8x1xf32> to vector<4x8x8xf32>
    %34 = arith.subf %30, %33 : vector<4x8x8xf32>
    %35 = math.exp %34 : vector<4x8x8xf32>
    %cst_14 = arith.constant dense<0.000000e+00> : vector<4x8xf32>
    %36 = vector.multi_reduction <add>, %35, %cst_14 [2] : vector<4x8x8xf32> to vector<4x8xf32>
    %37 = vector.shape_cast %36 : vector<4x8xf32> to vector<4x8x1xf32>
    %38 = tpu.reciprocal %37 {approx = true} : vector<4x8x1xf32> -> vector<4x8x1xf32>
    %39 = vector.broadcast %38 : vector<4x8x1xf32> to vector<4x8x8xf32>
    %40 = arith.mulf %35, %39 : vector<4x8x8xf32>
    %41 = arith.truncf %40 : vector<4x8x8xf32> to vector<4x8x8xbf16>
    %c0_15 = arith.constant 0 : index
    %c0_16 = arith.constant 0 : index
    %c0_17 = arith.constant 0 : index
    %42 = vector.load %arg22[%c0_15, %c0_16, %c0_17] : memref<4x8x8xbf16, #tpu.memory_space<vmem>>, vector<4x8x8xbf16>
    "tpu.trace_start"() <{level = 10 : i32, message = "hqk,hkd->hqd"}> : () -> ()
    %cst_18 = arith.constant dense<0.000000e+00> : vector<4x8x8xf32>
    %43 = tpu.matmul %41, %42, %cst_18 {dimension_numbers = #tpu.dot_dimension_numbers<[2], [1], [1], [2], [0, 0, 0, 1, 1, 2], [0], [0]>} : vector<4x8x8xbf16>, vector<4x8x8xbf16>, vector<4x8x8xf32> -> vector<4x8x8xf32>
    "tpu.trace_stop"() : () -> ()
    %44 = vector.extract_strided_slice %43 {offsets = [0, 0, 0], sizes = [1, 8, 8], strides = [1, 1, 1]} : vector<4x8x8xf32> to vector<1x8x8xf32>
    %45 = vector.shape_cast %44 : vector<1x8x8xf32> to vector<8x8xf32>
    %46 = vector.extract_strided_slice %43 {offsets = [1, 0, 0], sizes = [1, 8, 8], strides = [1, 1, 1]} : vector<4x8x8xf32> to vector<1x8x8xf32>
    %47 = vector.shape_cast %46 : vector<1x8x8xf32> to vector<8x8xf32>
    %48 = vector.extract_strided_slice %43 {offsets = [2, 0, 0], sizes = [1, 8, 8], strides = [1, 1, 1]} : vector<4x8x8xf32> to vector<1x8x8xf32>
    %49 = vector.shape_cast %48 : vector<1x8x8xf32> to vector<8x8xf32>
    %50 = vector.extract_strided_slice %43 {offsets = [3, 0, 0], sizes = [1, 8, 8], strides = [1, 1, 1]} : vector<4x8x8xf32> to vector<1x8x8xf32>
    %51 = vector.shape_cast %50 : vector<1x8x8xf32> to vector<8x8xf32>
    %52 = tpu.concatenate %45, %47, %49, %51 in 1 : vector<8x8xf32>, vector<8x8xf32>, vector<8x8xf32>, vector<8x8xf32> -> vector<8x32xf32>
    %53 = arith.truncf %52 : vector<8x32xf32> to vector<8x32xbf16>
    %c0_19 = arith.constant 0 : index
    %c0_20 = arith.constant 0 : index
    %54 = vector.load %arg10[%c0_19, %c0_20] : memref<32x32xbf16, #tpu.memory_space<vmem>>, vector<32x32xbf16>
    %cst_21 = arith.constant dense<0.000000e+00> : vector<8x32xf32>
    %55 = tpu.matmul %53, %54, %cst_21 {dimension_numbers = #tpu.dot_dimension_numbers<[1], [0], [0], [1], [0, 0, 1, 1], [], []>} : vector<8x32xbf16>, vector<32x32xbf16>, vector<8x32xf32> -> vector<8x32xf32>
    %c0_22 = arith.constant 0 : index
    %c0_23 = arith.constant 0 : index
    %56 = vector.load %arg11[%c0_22, %c0_23] : memref<1x32xf32, #tpu.memory_space<vmem>>, vector<1x32xf32>
    %57 = vector.broadcast %56 : vector<1x32xf32> to vector<8x32xf32>
    %58 = arith.addf %55, %57 : vector<8x32xf32>
    %59 = arith.addf %58, %7 : vector<8x32xf32>
    %c0_24 = arith.constant 0 : index
    %c0_25 = arith.constant 0 : index
    %60 = vector.load %arg12[%c0_24, %c0_25] : memref<1x32xf32, #tpu.memory_space<vmem>>, vector<1x32xf32>
    %c0_26 = arith.constant 0 : index
    %c0_27 = arith.constant 0 : index
    %61 = vector.load %arg13[%c0_26, %c0_27] : memref<1x32xf32, #tpu.memory_space<vmem>>, vector<1x32xf32>
    %cst_28 = arith.constant dense<0.000000e+00> : vector<8xf32>
    %62 = vector.multi_reduction <add>, %59, %cst_28 [1] : vector<8x32xf32> to vector<8xf32>
    %63 = vector.shape_cast %62 : vector<8xf32> to vector<8x1xf32>
    %cst_29 = arith.constant 3.200000e+01 : f32
    %64 = vector.broadcast %cst_29 : f32 to vector<8x1xf32>
    %65 = arith.divf %63, %64 : vector<8x1xf32>
    %66 = vector.broadcast %65 : vector<8x1xf32> to vector<8x32xf32>
    %67 = arith.subf %59, %66 : vector<8x32xf32>
    %68 = arith.mulf %67, %67 : vector<8x32xf32>
    %cst_30 = arith.constant dense<0.000000e+00> : vector<8xf32>
    %69 = vector.multi_reduction <add>, %68, %cst_30 [1] : vector<8x32xf32> to vector<8xf32>
    %70 = vector.shape_cast %69 : vector<8xf32> to vector<8x1xf32>
    %cst_31 = arith.constant 3.200000e+01 : f32
    %71 = vector.broadcast %cst_31 : f32 to vector<8x1xf32>
    %72 = arith.divf %70, %71 : vector<8x1xf32>
    %cst_32 = arith.constant 9.99999996E-13 : f32
    %73 = vector.broadcast %cst_32 : f32 to vector<8x1xf32>
    %74 = arith.addf %72, %73 : vector<8x1xf32>
    %75 = math.rsqrt %74 : vector<8x1xf32>
    %76 = vector.broadcast %75 : vector<8x1xf32> to vector<8x32xf32>
    %77 = arith.mulf %67, %76 : vector<8x32xf32>
    %78 = vector.broadcast %60 : vector<1x32xf32> to vector<8x32xf32>
    %79 = arith.mulf %77, %78 : vector<8x32xf32>
    %80 = vector.broadcast %61 : vector<1x32xf32> to vector<8x32xf32>
    %81 = arith.addf %79, %80 : vector<8x32xf32>
    %82 = arith.truncf %81 : vector<8x32xf32> to vector<8x32xbf16>
    %c0_33 = arith.constant 0 : index
    %c0_34 = arith.constant 0 : index
    %83 = vector.load %arg14[%c0_33, %c0_34] : memref<32x64xbf16, #tpu.memory_space<vmem>>, vector<32x64xbf16>
    %cst_35 = arith.constant dense<0.000000e+00> : vector<8x64xf32>
    %84 = tpu.matmul %82, %83, %cst_35 {dimension_numbers = #tpu.dot_dimension_numbers<[1], [0], [0], [1], [0, 0, 1, 1], [], []>} : vector<8x32xbf16>, vector<32x64xbf16>, vector<8x64xf32> -> vector<8x64xf32>
    %c0_36 = arith.constant 0 : index
    %c0_37 = arith.constant 0 : index
    %85 = vector.load %arg15[%c0_36, %c0_37] : memref<1x64xf32, #tpu.memory_space<vmem>>, vector<1x64xf32>
    %86 = vector.broadcast %85 : vector<1x64xf32> to vector<8x64xf32>
    %87 = arith.addf %84, %86 : vector<8x64xf32>
    %cst_38 = arith.constant 5.000000e-01 : f32
    %88 = vector.broadcast %cst_38 : f32 to vector<8x64xf32>
    %89 = arith.mulf %88, %87 : vector<8x64xf32>
    %cst_39 = arith.constant 4.471500e-02 : f32
    %90 = vector.broadcast %cst_39 : f32 to vector<8x64xf32>
    %91 = arith.mulf %90, %87 : vector<8x64xf32>
    %92 = arith.mulf %91, %87 : vector<8x64xf32>
    %93 = arith.mulf %92, %87 : vector<8x64xf32>
    %94 = arith.addf %87, %93 : vector<8x64xf32>
    %cst_40 = arith.constant 0.797884583 : f32
    %95 = vector.broadcast %cst_40 : f32 to vector<8x64xf32>
    %96 = arith.mulf %95, %94 : vector<8x64xf32>
    %97 = math.tanh %96 : vector<8x64xf32>
    %cst_41 = arith.constant 1.000000e+00 : f32
    %98 = vector.broadcast %cst_41 : f32 to vector<8x64xf32>
    %99 = arith.addf %98, %97 : vector<8x64xf32>
    %100 = arith.mulf %89, %99 : vector<8x64xf32>
    %101 = arith.truncf %100 : vector<8x64xf32> to vector<8x64xbf16>
    %c0_42 = arith.constant 0 : index
    %c0_43 = arith.constant 0 : index
    %102 = vector.load %arg16[%c0_42, %c0_43] : memref<64x32xbf16, #tpu.memory_space<vmem>>, vector<64x32xbf16>
    %cst_44 = arith.constant dense<0.000000e+00> : vector<8x32xf32>
    %103 = tpu.matmul %101, %102, %cst_44 {dimension_numbers = #tpu.dot_dimension_numbers<[1], [0], [0], [1], [0, 0, 1, 1], [], []>} : vector<8x64xbf16>, vector<64x32xbf16>, vector<8x32xf32> -> vector<8x32xf32>
    %c0_45 = arith.constant 0 : index
    %c0_46 = arith.constant 0 : index
    %104 = vector.load %arg17[%c0_45, %c0_46] : memref<1x32xf32, #tpu.memory_space<vmem>>, vector<1x32xf32>
    %105 = vector.broadcast %104 : vector<1x32xf32> to vector<8x32xf32>
    %106 = arith.addf %103, %105 : vector<8x32xf32>
    %107 = arith.addf %106, %81 : vector<8x32xf32>
    %c0_47 = arith.constant 0 : index
    %c0_48 = arith.constant 0 : index
    %108 = vector.load %arg18[%c0_47, %c0_48] : memref<1x32xf32, #tpu.memory_space<vmem>>, vector<1x32xf32>
    %c0_49 = arith.constant 0 : index
    %c0_50 = arith.constant 0 : index
    %109 = vector.load %arg19[%c0_49, %c0_50] : memref<1x32xf32, #tpu.memory_space<vmem>>, vector<1x32xf32>
    %cst_51 = arith.constant dense<0.000000e+00> : vector<8xf32>
    %110 = vector.multi_reduction <add>, %107, %cst_51 [1] : vector<8x32xf32> to vector<8xf32>
    %111 = vector.shape_cast %110 : vector<8xf32> to vector<8x1xf32>
    %cst_52 = arith.constant 3.200000e+01 : f32
    %112 = vector.broadcast %cst_52 : f32 to vector<8x1xf32>
    %113 = arith.divf %111, %112 : vector<8x1xf32>
    %114 = vector.broadcast %113 : vector<8x1xf32> to vector<8x32xf32>
    %115 = arith.subf %107, %114 : vector<8x32xf32>
    %116 = arith.mulf %115, %115 : vector<8x32xf32>
    %cst_53 = arith.constant dense<0.000000e+00> : vector<8xf32>
    %117 = vector.multi_reduction <add>, %116, %cst_53 [1] : vector<8x32xf32> to vector<8xf32>
    %118 = vector.shape_cast %117 : vector<8xf32> to vector<8x1xf32>
    %cst_54 = arith.constant 3.200000e+01 : f32
    %119 = vector.broadcast %cst_54 : f32 to vector<8x1xf32>
    %120 = arith.divf %118, %119 : vector<8x1xf32>
    %cst_55 = arith.constant 9.99999996E-13 : f32
    %121 = vector.broadcast %cst_55 : f32 to vector<8x1xf32>
    %122 = arith.addf %120, %121 : vector<8x1xf32>
    %123 = math.rsqrt %122 : vector<8x1xf32>
    %124 = vector.broadcast %123 : vector<8x1xf32> to vector<8x32xf32>
    %125 = arith.mulf %115, %124 : vector<8x32xf32>
    %126 = vector.broadcast %108 : vector<1x32xf32> to vector<8x32xf32>
    %127 = arith.mulf %125, %126 : vector<8x32xf32>
    %128 = vector.broadcast %109 : vector<1x32xf32> to vector<8x32xf32>
    %129 = arith.addf %127, %128 : vector<8x32xf32>
    %c0_56 = arith.constant 0 : index
    %c0_57 = arith.constant 0 : index
    %c0_58 = arith.constant 0 : index
    %130 = vector.load %arg20[%c0_56, %c0_57, %c0_58] : memref<1x8x32xf32, #tpu.memory_space<vmem>>, vector<1x8x32xf32>
    %131 = vector.shape_cast %130 : vector<1x8x32xf32> to vector<8x32xf32>
    %132 = vector.shape_cast %129 : vector<8x32xf32> to vector<1x8x32xf32>
    tpu.vector_store %arg20[%c0_56, %c0_57, %c0_58], %132 {strides = array<i32>} : memref<1x8x32xf32, #tpu.memory_space<vmem>>, vector<1x8x32xf32>,
    return
  }
  func.func @transform_0(%arg0: i32, %arg1: i32) -> (i32, i32, i32) {
    %c0_i32 = arith.constant 0 : i32
    %c0_i32_0 = arith.constant 0 : i32
    %c0_i32_1 = arith.constant 0 : i32
    return %arg0, %c0_i32, %c0_i32_0 : i32, i32, i32
  }
  func.func @transform_1(%arg0: i32, %arg1: i32) -> (i32, i32, i32) {
    %c0_i32 = arith.constant 0 : i32
    %c0_i32_0 = arith.constant 0 : i32
    %c0_i32_1 = arith.constant 0 : i32
    return %arg0, %c0_i32, %c0_i32_0 : i32, i32, i32
  }
  func.func @transform_2(%arg0: i32, %arg1: i32) -> (i32, i32) {
    %c0_i32 = arith.constant 0 : i32
    %c0_i32_0 = arith.constant 0 : i32
    %c0_i32_1 = arith.constant 0 : i32
    return %c0_i32, %c0_i32_0 : i32, i32
  }
  func.func @transform_3(%arg0: i32, %arg1: i32) -> (i32, i32) {
    %c0_i32 = arith.constant 0 : i32
    %c0_i32_0 = arith.constant 0 : i32
    %c0_i32_1 = arith.constant 0 : i32
    return %c0_i32, %c0_i32_0 : i32, i32
  }
  func.func @transform_4(%arg0: i32, %arg1: i32) -> (i32, i32) {
    %c0_i32 = arith.constant 0 : i32
    %c0_i32_0 = arith.constant 0 : i32
    %c0_i32_1 = arith.constant 0 : i32
    return %c0_i32, %c0_i32_0 : i32, i32
  }
  func.func @transform_5(%arg0: i32, %arg1: i32) -> (i32, i32) {
    %c0_i32 = arith.constant 0 : i32
    %c0_i32_0 = arith.constant 0 : i32
    %c0_i32_1 = arith.constant 0 : i32
    return %c0_i32, %c0_i32_0 : i32, i32
  }
  func.func @transform_6(%arg0: i32, %arg1: i32) -> (i32, i32) {
    %c0_i32 = arith.constant 0 : i32
    %c0_i32_0 = arith.constant 0 : i32
    %c0_i32_1 = arith.constant 0 : i32
    return %c0_i32, %c0_i32_0 : i32, i32
  }
  func.func @transform_7(%arg0: i32, %arg1: i32) -> (i32, i32) {
    %c0_i32 = arith.constant 0 : i32
    %c0_i32_0 = arith.constant 0 : i32
    %c0_i32_1 = arith.constant 0 : i32
    return %c0_i32, %c0_i32_0 : i32, i32
  }
  func.func @transform_8(%arg0: i32, %arg1: i32) -> (i32, i32) {
    %c0_i32 = arith.constant 0 : i32
    %c0_i32_0 = arith.constant 0 : i32
    %c0_i32_1 = arith.constant 0 : i32
    return %c0_i32, %c0_i32_0 : i32, i32
  }
  func.func @transform_9(%arg0: i32, %arg1: i32) -> (i32, i32) {
    %c0_i32 = arith.constant 0 : i32
    %c0_i32_0 = arith.constant 0 : i32
    %c0_i32_1 = arith.constant 0 : i32
    return %c0_i32, %c0_i32_0 : i32, i32
  }
  func.func @transform_10(%arg0: i32, %arg1: i32) -> (i32, i32) {
    %c0_i32 = arith.constant 0 : i32
    %c0_i32_0 = arith.constant 0 : i32
    %c0_i32_1 = arith.constant 0 : i32
    return %c0_i32, %c0_i32_0 : i32, i32
  }
  func.func @transform_11(%arg0: i32, %arg1: i32) -> (i32, i32) {
    %c0_i32 = arith.constant 0 : i32
    %c0_i32_0 = arith.constant 0 : i32
    %c0_i32_1 = arith.constant 0 : i32
    return %c0_i32, %c0_i32_0 : i32, i32
  }
  func.func @transform_12(%arg0: i32, %arg1: i32) -> (i32, i32) {
    %c0_i32 = arith.constant 0 : i32
    %c0_i32_0 = arith.constant 0 : i32
    %c0_i32_1 = arith.constant 0 : i32
    return %c0_i32, %c0_i32_0 : i32, i32
  }
  func.func @transform_13(%arg0: i32, %arg1: i32) -> (i32, i32) {
    %c0_i32 = arith.constant 0 : i32
    %c0_i32_0 = arith.constant 0 : i32
    %c0_i32_1 = arith.constant 0 : i32
    return %c0_i32, %c0_i32_0 : i32, i32
  }
  func.func @transform_14(%arg0: i32, %arg1: i32) -> (i32, i32) {
    %c0_i32 = arith.constant 0 : i32
    %c0_i32_0 = arith.constant 0 : i32
    %c0_i32_1 = arith.constant 0 : i32
    return %c0_i32, %c0_i32_0 : i32, i32
  }
  func.func @transform_15(%arg0: i32, %arg1: i32) -> (i32, i32) {
    %c0_i32 = arith.constant 0 : i32
    %c0_i32_0 = arith.constant 0 : i32
    %c0_i32_1 = arith.constant 0 : i32
    return %c0_i32, %c0_i32_0 : i32, i32
  }
  func.func @transform_16(%arg0: i32, %arg1: i32) -> (i32, i32) {
    %c0_i32 = arith.constant 0 : i32
    %c0_i32_0 = arith.constant 0 : i32
    %c0_i32_1 = arith.constant 0 : i32
    return %c0_i32, %c0_i32_0 : i32, i32
  }
  func.func @transform_17(%arg0: i32, %arg1: i32) -> (i32, i32) {
    %c0_i32 = arith.constant 0 : i32
    %c0_i32_0 = arith.constant 0 : i32
    %c0_i32_1 = arith.constant 0 : i32
    return %c0_i32, %c0_i32_0 : i32, i32
  }
  func.func @transform_18(%arg0: i32, %arg1: i32) -> (i32, i32, i32) {
    %c0_i32 = arith.constant 0 : i32
    %c0_i32_0 = arith.constant 0 : i32
    return %arg0, %arg1, %c0_i32 : i32, i32, i32
  }
}

</mosaic_0001>

<llo_original>
// kernel: tpu_custom_call.1
$region0: #{tpu_custom_call.1}
  #allocation0 [shape = 'u32[]', space=smem, size = 0x4, offset = 0x4, fixed_abs, tag = 'smem constant byte address 0x4 - core index']
  #allocation1 [shape = 'u32[72,128]{1,0:T(1,128)}', space=vmem, size = 0x9000, scoped, tag = 'internal scratch']
  #allocation2 [shape = 'bf16[4,8,8]{2,1,0:T(8,128)(2,1)}', space=vmem, size = 0x2000, scoped, tag = 'scratch operand']
  #allocation3 [shape = 'bf16[4,8,8]{2,1,0:T(8,128)(2,1)}', space=vmem, size = 0x2000, scoped, tag = 'scratch operand']
  %s0 = inlined_call_operand.vmem [shape: f32[2,8,32], index: 0, kind: input, shape index: {}]
  %s1 = inlined_call_operand.hbm [shape: f32[2,1,8], index: 1, kind: input, shape index: {}]
  %s2 = inlined_call_operand.vmem [shape: bf16[32,32], index: 2, kind: input, shape index: {}]
  %s3 = inlined_call_operand.vmem [shape: f32[1,32], index: 3, kind: input, shape index: {}]
  %s4 = inlined_call_operand.vmem [shape: bf16[32,32], index: 4, kind: input, shape index: {}]
  %s5 = inlined_call_operand.vmem [shape: f32[1,32], index: 5, kind: input, shape index: {}]
  %s6 = inlined_call_operand.hbm [shape: bf16[32,32], index: 6, kind: input, shape index: {}]
  %s7 = inlined_call_operand.vmem [shape: f32[1,32], index: 7, kind: input, shape index: {}]
  %s8 = inlined_call_operand.hbm [shape: bf16[32,32], index: 8, kind: input, shape index: {}]
  %s9 = inlined_call_operand.vmem [shape: f32[1,32], index: 9, kind: input, shape index: {}]
  %s10 = inlined_call_operand.vmem [shape: f32[1,32], index: 10, kind: input, shape index: {}]
  %s11 = inlined_call_operand.vmem [shape: f32[1,32], index: 11, kind: input, shape index: {}]
  %s12 = inlined_call_operand.hbm [shape: bf16[32,64], index: 12, kind: input, shape index: {}]
  %s13 = inlined_call_operand.vmem [shape: f32[1,64], index: 13, kind: input, shape index: {}]
  %s14 = inlined_call_operand.vmem [shape: bf16[64,32], index: 14, kind: input, shape index: {}]
  %s15 = inlined_call_operand.vmem [shape: f32[1,32], index: 15, kind: input, shape index: {}]
  %s16 = inlined_call_operand.vmem [shape: f32[1,32], index: 16, kind: input, shape index: {}]
  %s17 = inlined_call_operand.vmem [shape: f32[1,32], index: 17, kind: input, shape index: {}]
  %s18 = inlined_call_operand.hbm [shape: f32[2,8,32], index: 18, kind: output, shape index: {}]
  %s19 = sld [smem:[#allocation0]]
  $region125: #{tpu_custom_call.1} parent=0
    _
  %s21 = ssub.s32 1, %s19
  %s22 = scalar_select 0, %s21, %s19
  $region1: #{tpu_custom_call.1} parent=0
    #allocation4 [shape = 'u8[1024]{0}', space=vmem, size = 0x400, scoped, tag = 'input window, operand 1']
    #allocation5 [shape = 's32[2]{0}', space=sflag, size = 0x8, scoped, tag = 'scoped memory for tpu_custom_call.1']
    #allocation6 [shape = 's32[2]{0}', space=sflag, size = 0x8, scoped, tag = 'scoped memory for tpu_custom_call.1']
    #allocation7 [shape = 'u8[8192]{0}', space=vmem, size = 0x2000, scoped, tag = 'input window, operand 6, single buffered']
    #allocation8 [shape = 's32[1]{0}', space=sflag, size = 0x4, scoped, tag = 'scoped memory for tpu_custom_call.1']
    #allocation9 [shape = 'u8[8192]{0}', space=vmem, size = 0x2000, scoped, tag = 'input window, operand 8, single buffered']
    #allocation10 [shape = 'u8[8192]{0}', space=vmem, size = 0x2000, scoped, tag = 'input window, operand 12, single buffered']
    #allocation11 [shape = 's32[1]{0}', space=sflag, size = 0x4, scoped, tag = 'scoped memory for tpu_custom_call.1']
    #allocation12 [shape = 'u8[8192]{0}', space=vmem, size = 0x2000, scoped, tag = 'output window, operand 0']
    %23 = vsyncpa [#allocation5], 0
    %s24 = scalar_lea.sflag [#allocation5], 1
    %25 = vsyncpa %s24, 0
    %26 = vsyncpa [#allocation8], 0
    %27 = vsyncpa [#allocation11], 0
    %28 = vsyncpa [#allocation6], 0
    %s29 = scalar_lea.sflag [#allocation6], 1
    %30 = vsyncpa %s29, 0
    loop: start=0, step=1, limit=4
    $region2: #{tpu_custom_call.1} parent=1 // loop_pre_header
      _
    $region3: #{tpu_custom_call.1} parent=1 // loop_header
      %s32 = sphi 0, %s36
      %p33 = scmp.ge.s32.totalorder %s32, 4
      %s39 = sphi 0, %s51
      %s40 = sphi 0, %s47
      %s41 = sphi 0, %s39
      %s42 = sphi 0, %s40
      %s43 = sphi 0, %s41
      %s44 = sphi 0, %s42
      %s54 = sphi 0, %s56
      %s57 = sphi 0, %s54
      %s58 = sphi 0, %s57
      %s74 = sphi 0, %s58
      %s80 = sphi 0, %s82
      %s83 = sphi 0, %s80
      %s84 = sphi 0, %s83
      %s100 = sphi 0, %s84
      %s104 = sphi 0, %s104
      %s106 = sphi 0, %s104
      %s107 = sphi 0, %s106
      %s121 = sphi 0, %s107
      %s125 = sphi 0, %s125
      %s127 = sphi 0, %s125
      %s128 = sphi 0, %s127
      %s142 = sphi 0, %s128
      %s146 = sphi 0, %s146
      %s148 = sphi 0, %s146
      %s149 = sphi 0, %s148
      %s163 = sphi 0, %s149
      %s167 = sphi 0, %s167
      %s169 = sphi 0, %s167
      %s170 = sphi 0, %s169
      %s184 = sphi 0, %s170
      %s188 = sphi 0, %s188
      %s190 = sphi 0, %s188
      %s191 = sphi 0, %s190
      %s205 = sphi 0, %s191
      %s209 = sphi 0, %s209
      %s211 = sphi 0, %s209
      %s212 = sphi 0, %s211
      %s226 = sphi 0, %s212
      %s230 = sphi 0, %s230
      %s232 = sphi 0, %s230
      %s233 = sphi 0, %s232
      %s247 = sphi 0, %s233
      %s251 = sphi 0, %s251
      %s253 = sphi 0, %s251
      %s254 = sphi 0, %s253
      %s268 = sphi 0, %s254
      %s272 = sphi 0, %s272
      %s274 = sphi 0, %s272
      %s275 = sphi 0, %s274
      %s289 = sphi 0, %s275
      %s293 = sphi 0, %s293
      %s295 = sphi 0, %s293
      %s296 = sphi 0, %s295
      %s310 = sphi 0, %s296
      %s314 = sphi 0, %s314
      %s316 = sphi 0, %s314
      %s317 = sphi 0, %s316
      %s331 = sphi 0, %s317
      %s335 = sphi 0, %s335
      %s337 = sphi 0, %s335
      %s338 = sphi 0, %s337
      %s352 = sphi 0, %s338
      %s356 = sphi 0, %s356
      %s358 = sphi 0, %s356
      %s359 = sphi 0, %s358
      %s373 = sphi 0, %s359
      %s377 = sphi 0, %s377
      %s379 = sphi 0, %s377
      %s380 = sphi 0, %s379
      %s394 = sphi 0, %s380
      %s398 = sphi 0, %s398
      %s400 = sphi 0, %s398
      %s401 = sphi 0, %s400
      %s415 = sphi 0, %s401
      %s419 = sphi 0, %s419
      %s421 = sphi 0, %s419
      %s422 = sphi 0, %s421
      %s436 = sphi 0, %s422
      %s444 = sphi 0, %s446
      %s447 = sphi 0, %s444
      %s448 = sphi 0, %s447
      %s464 = sphi 0, %s448
    $region4: #{tpu_custom_call.1} parent=1 // loop_header_branch
      %35 = sbr.rel (%p33) target = $region8
    $region5: #{tpu_custom_call.1} parent=1 // loop_body
      %s37 = ssub.s32 %s32, 1
      %s38 = ssub.s32 %s32, 2
      %s45 = sadd.s32 1, %s40
      %p46 = scmp.ge.s32.totalorder %s45, 1
      %s47 = scalar_select %p46, 0, %s45
      %s48 = sadd.s32 1, %s39
      %s49 = scalar_select %p46, %s48, %s39
      %p50 = scmp.ge.s32.totalorder %s49, 2
      %s51 = scalar_select %p50, 0, %s49
      %s52 = ssub.s32 %s39, %s51
      %p53 = scmp.eq.s32.totalorder %s52, 0
      %s55 = sadd.s32 %s54, 1
      %s56 = scalar_select %p53, %s54, %s55
      %p59 = pneg %p53
      %p60 = scmp.eq.s32.totalorder %s32, 1
      %p61 = por %p59, %p60
      %p62 = scmp.ne.s32.totalorder %s54, %s57
      %p63 = scmp.eq.s32.totalorder %s32, 0
      %p64 = por %p62, %p63
      %p65 = scmp.ne.s32.totalorder %s54, %s57
      %p66 = scmp.eq.s32.totalorder %s37, 1
      %p67 = por %p65, %p66
      %p68 = scmp.ne.s32.totalorder %s57, %s58
      %p69 = scmp.eq.s32.totalorder %s37, 0
      %p70 = por %p68, %p69
      %p71 = scmp.ne.s32.totalorder %s57, %s58
      %p72 = scmp.eq.s32.totalorder %s38, 1
      %p73 = por %p71, %p72
      %p75 = scmp.ne.s32.totalorder %s58, %s74
      %p76 = scmp.eq.s32.totalorder %s38, 0
      %p77 = por %p75, %p76
      %s78 = ssub.s32 %s39, %s51
      %p79 = scmp.eq.s32.totalorder %s78, 0
      %s81 = sadd.s32 %s80, 1
      %s82 = scalar_select %p79, %s80, %s81
      %p85 = pneg %p79
      %p86 = scmp.eq.s32.totalorder %s32, 1
      %p87 = por %p85, %p86
      %p88 = scmp.ne.s32.totalorder %s80, %s83
      %p89 = scmp.eq.s32.totalorder %s32, 0
      %p90 = por %p88, %p89
      %p91 = scmp.ne.s32.totalorder %s80, %s83
      %p92 = scmp.eq.s32.totalorder %s37, 1
      %p93 = por %p91, %p92
      %p94 = scmp.ne.s32.totalorder %s83, %s84
      %p95 = scmp.eq.s32.totalorder %s37, 0
      %p96 = por %p94, %p95
      %p97 = scmp.ne.s32.totalorder %s83, %s84
      %p98 = scmp.eq.s32.totalorder %s38, 1
      %p99 = por %p97, %p98
      %p101 = scmp.ne.s32.totalorder %s84, %s100
      %p102 = scmp.eq.s32.totalorder %s38, 0
      %p103 = por %p101, %p102
      %s105 = sadd.s32 %s104, 1
      %p108 = scmp.eq.s32.totalorder %s32, 1
      %p109 = scmp.ne.s32.totalorder %s104, %s106
      %p110 = scmp.eq.s32.totalorder %s32, 0
      %p111 = por %p109, %p110
      %p112 = scmp.ne.s32.totalorder %s104, %s106
      %p113 = scmp.eq.s32.totalorder %s37, 1
      %p114 = por %p112, %p113
      %p115 = scmp.ne.s32.totalorder %s106, %s107
      %p116 = scmp.eq.s32.totalorder %s37, 0
      %p117 = por %p115, %p116
      %p118 = scmp.ne.s32.totalorder %s106, %s107
      %p119 = scmp.eq.s32.totalorder %s38, 1
      %p120 = por %p118, %p119
      %p122 = scmp.ne.s32.totalorder %s107, %s121
      %p123 = scmp.eq.s32.totalorder %s38, 0
      %p124 = por %p122, %p123
      %s126 = sadd.s32 %s125, 1
      %p129 = scmp.eq.s32.totalorder %s32, 1
      %p130 = scmp.ne.s32.totalorder %s125, %s127
      %p131 = scmp.eq.s32.totalorder %s32, 0
      %p132 = por %p130, %p131
      %p133 = scmp.ne.s32.totalorder %s125, %s127
      %p134 = scmp.eq.s32.totalorder %s37, 1
      %p135 = por %p133, %p134
      %p136 = scmp.ne.s32.totalorder %s127, %s128
      %p137 = scmp.eq.s32.totalorder %s37, 0
      %p138 = por %p136, %p137
      %p139 = scmp.ne.s32.totalorder %s127, %s128
      %p140 = scmp.eq.s32.totalorder %s38, 1
      %p141 = por %p139, %p140
      %p143 = scmp.ne.s32.totalorder %s128, %s142
      %p144 = scmp.eq.s32.totalorder %s38, 0
      %p145 = por %p143, %p144
      %s147 = sadd.s32 %s146, 1
      %p150 = scmp.eq.s32.totalorder %s32, 1
      %p151 = scmp.ne.s32.totalorder %s146, %s148
      %p152 = scmp.eq.s32.totalorder %s32, 0
      %p153 = por %p151, %p152
      %p154 = scmp.ne.s32.totalorder %s146, %s148
      %p155 = scmp.eq.s32.totalorder %s37, 1
      %p156 = por %p154, %p155
      %p157 = scmp.ne.s32.totalorder %s148, %s149
      %p158 = scmp.eq.s32.totalorder %s37, 0
      %p159 = por %p157, %p158
      %p160 = scmp.ne.s32.totalorder %s148, %s149
      %p161 = scmp.eq.s32.totalorder %s38, 1
      %p162 = por %p160, %p161
      %p164 = scmp.ne.s32.totalorder %s149, %s163
      %p165 = scmp.eq.s32.totalorder %s38, 0
      %p166 = por %p164, %p165
      %s168 = sadd.s32 %s167, 1
      %p171 = scmp.eq.s32.totalorder %s32, 1
      %p172 = scmp.ne.s32.totalorder %s167, %s169
      %p173 = scmp.eq.s32.totalorder %s32, 0
      %p174 = por %p172, %p173
      %p175 = scmp.ne.s32.totalorder %s167, %s169
      %p176 = scmp.eq.s32.totalorder %s37, 1
      %p177 = por %p175, %p176
      %p178 = scmp.ne.s32.totalorder %s169, %s170
      %p179 = scmp.eq.s32.totalorder %s37, 0
      %p180 = por %p178, %p179
      %p181 = scmp.ne.s32.totalorder %s169, %s170
      %p182 = scmp.eq.s32.totalorder %s38, 1
      %p183 = por %p181, %p182
      %p185 = scmp.ne.s32.totalorder %s170, %s184
      %p186 = scmp.eq.s32.totalorder %s38, 0
      %p187 = por %p185, %p186
      %s189 = sadd.s32 %s188, 1
      %p192 = scmp.eq.s32.totalorder %s32, 1
      %p193 = scmp.ne.s32.totalorder %s188, %s190
      %p194 = scmp.eq.s32.totalorder %s32, 0
      %p195 = por %p193, %p194
      %p196 = scmp.ne.s32.totalorder %s188, %s190
      %p197 = scmp.eq.s32.totalorder %s37, 1
      %p198 = por %p196, %p197
      %p199 = scmp.ne.s32.totalorder %s190, %s191
      %p200 = scmp.eq.s32.totalorder %s37, 0
      %p201 = por %p199, %p200
      %p202 = scmp.ne.s32.totalorder %s190, %s191
      %p203 = scmp.eq.s32.totalorder %s38, 1
      %p204 = por %p202, %p203
      %p206 = scmp.ne.s32.totalorder %s191, %s205
      %p207 = scmp.eq.s32.totalorder %s38, 0
      %p208 = por %p206, %p207
      %s210 = sadd.s32 %s209, 1
      %p213 = scmp.eq.s32.totalorder %s32, 1
      %p214 = scmp.ne.s32.totalorder %s209, %s211
      %p215 = scmp.eq.s32.totalorder %s32, 0
      %p216 = por %p214, %p215
      %p217 = scmp.ne.s32.totalorder %s209, %s211
      %p218 = scmp.eq.s32.totalorder %s37, 1
      %p219 = por %p217, %p218
      %p220 = scmp.ne.s32.totalorder %s211, %s212
      %p221 = scmp.eq.s32.totalorder %s37, 0
      %p222 = por %p220, %p221
      %p223 = scmp.ne.s32.totalorder %s211, %s212
      %p224 = scmp.eq.s32.totalorder %s38, 1
      %p225 = por %p223, %p224
      %p227 = scmp.ne.s32.totalorder %s212, %s226
      %p228 = scmp.eq.s32.totalorder %s38, 0
      %p229 = por %p227, %p228
      %s231 = sadd.s32 %s230, 1
      %p234 = scmp.eq.s32.totalorder %s32, 1
      %p235 = scmp.ne.s32.totalorder %s230, %s232
      %p236 = scmp.eq.s32.totalorder %s32, 0
      %p237 = por %p235, %p236
      %p238 = scmp.ne.s32.totalorder %s230, %s232
      %p239 = scmp.eq.s32.totalorder %s37, 1
      %p240 = por %p238, %p239
      %p241 = scmp.ne.s32.totalorder %s232, %s233
      %p242 = scmp.eq.s32.totalorder %s37, 0
      %p243 = por %p241, %p242
      %p244 = scmp.ne.s32.totalorder %s232, %s233
      %p245 = scmp.eq.s32.totalorder %s38, 1
      %p246 = por %p244, %p245
      %p248 = scmp.ne.s32.totalorder %s233, %s247
      %p249 = scmp.eq.s32.totalorder %s38, 0
      %p250 = por %p248, %p249
      %s252 = sadd.s32 %s251, 1
      %p255 = scmp.eq.s32.totalorder %s32, 1
      %p256 = scmp.ne.s32.totalorder %s251, %s253
      %p257 = scmp.eq.s32.totalorder %s32, 0
      %p258 = por %p256, %p257
      %p259 = scmp.ne.s32.totalorder %s251, %s253
      %p260 = scmp.eq.s32.totalorder %s37, 1
      %p261 = por %p259, %p260
      %p262 = scmp.ne.s32.totalorder %s253, %s254
      %p263 = scmp.eq.s32.totalorder %s37, 0
      %p264 = por %p262, %p263
      %p265 = scmp.ne.s32.totalorder %s253, %s254
      %p266 = scmp.eq.s32.totalorder %s38, 1
      %p267 = por %p265, %p266
      %p269 = scmp.ne.s32.totalorder %s254, %s268
      %p270 = scmp.eq.s32.totalorder %s38, 0
      %p271 = por %p269, %p270
      %s273 = sadd.s32 %s272, 1
      %p276 = scmp.eq.s32.totalorder %s32, 1
      %p277 = scmp.ne.s32.totalorder %s272, %s274
      %p278 = scmp.eq.s32.totalorder %s32, 0
      %p279 = por %p277, %p278
      %p280 = scmp.ne.s32.totalorder %s272, %s274
      %p281 = scmp.eq.s32.totalorder %s37, 1
      %p282 = por %p280, %p281
      %p283 = scmp.ne.s32.totalorder %s274, %s275
      %p284 = scmp.eq.s32.totalorder %s37, 0
      %p285 = por %p283, %p284
      %p286 = scmp.ne.s32.totalorder %s274, %s275
      %p287 = scmp.eq.s32.totalorder %s38, 1
      %p288 = por %p286, %p287
      %p290 = scmp.ne.s32.totalorder %s275, %s289
      %p291 = scmp.eq.s32.totalorder %s38, 0
      %p292 = por %p290, %p291
      %s294 = sadd.s32 %s293, 1
      %p297 = scmp.eq.s32.totalorder %s32, 1
      %p298 = scmp.ne.s32.totalorder %s293, %s295
      %p299 = scmp.eq.s32.totalorder %s32, 0
      %p300 = por %p298, %p299
      %p301 = scmp.ne.s32.totalorder %s293, %s295
      %p302 = scmp.eq.s32.totalorder %s37, 1
      %p303 = por %p301, %p302
      %p304 = scmp.ne.s32.totalorder %s295, %s296
      %p305 = scmp.eq.s32.totalorder %s37, 0
      %p306 = por %p304, %p305
      %p307 = scmp.ne.s32.totalorder %s295, %s296
      %p308 = scmp.eq.s32.totalorder %s38, 1
      %p309 = por %p307, %p308
      %p311 = scmp.ne.s32.totalorder %s296, %s310
      %p312 = scmp.eq.s32.totalorder %s38, 0
      %p313 = por %p311, %p312
      %s315 = sadd.s32 %s314, 1
      %p318 = scmp.eq.s32.totalorder %s32, 1
      %p319 = scmp.ne.s32.totalorder %s314, %s316
      %p320 = scmp.eq.s32.totalorder %s32, 0
      %p321 = por %p319, %p320
      %p322 = scmp.ne.s32.totalorder %s314, %s316
      %p323 = scmp.eq.s32.totalorder %s37, 1
      %p324 = por %p322, %p323
      %p325 = scmp.ne.s32.totalorder %s316, %s317
      %p326 = scmp.eq.s32.totalorder %s37, 0
      %p327 = por %p325, %p326
      %p328 = scmp.ne.s32.totalorder %s316, %s317
      %p329 = scmp.eq.s32.totalorder %s38, 1
      %p330 = por %p328, %p329
      %p332 = scmp.ne.s32.totalorder %s317, %s331
      %p333 = scmp.eq.s32.totalorder %s38, 0
      %p334 = por %p332, %p333
      %s336 = sadd.s32 %s335, 1
      %p339 = scmp.eq.s32.totalorder %s32, 1
      %p340 = scmp.ne.s32.totalorder %s335, %s337
      %p341 = scmp.eq.s32.totalorder %s32, 0
      %p342 = por %p340, %p341
      %p343 = scmp.ne.s32.totalorder %s335, %s337
      %p344 = scmp.eq.s32.totalorder %s37, 1
      %p345 = por %p343, %p344
      %p346 = scmp.ne.s32.totalorder %s337, %s338
      %p347 = scmp.eq.s32.totalorder %s37, 0
      %p348 = por %p346, %p347
      %p349 = scmp.ne.s32.totalorder %s337, %s338
      %p350 = scmp.eq.s32.totalorder %s38, 1
      %p351 = por %p349, %p350
      %p353 = scmp.ne.s32.totalorder %s338, %s352
      %p354 = scmp.eq.s32.totalorder %s38, 0
      %p355 = por %p353, %p354
      %s357 = sadd.s32 %s356, 1
      %p360 = scmp.eq.s32.totalorder %s32, 1
      %p361 = scmp.ne.s32.totalorder %s356, %s358
      %p362 = scmp.eq.s32.totalorder %s32, 0
      %p363 = por %p361, %p362
      %p364 = scmp.ne.s32.totalorder %s356, %s358
      %p365 = scmp.eq.s32.totalorder %s37, 1
      %p366 = por %p364, %p365
      %p367 = scmp.ne.s32.totalorder %s358, %s359
      %p368 = scmp.eq.s32.totalorder %s37, 0
      %p369 = por %p367, %p368
      %p370 = scmp.ne.s32.totalorder %s358, %s359
      %p371 = scmp.eq.s32.totalorder %s38, 1
      %p372 = por %p370, %p371
      %p374 = scmp.ne.s32.totalorder %s359, %s373
      %p375 = scmp.eq.s32.totalorder %s38, 0
      %p376 = por %p374, %p375
      %s378 = sadd.s32 %s377, 1
      %p381 = scmp.eq.s32.totalorder %s32, 1
      %p382 = scmp.ne.s32.totalorder %s377, %s379
      %p383 = scmp.eq.s32.totalorder %s32, 0
      %p384 = por %p382, %p383
      %p385 = scmp.ne.s32.totalorder %s377, %s379
      %p386 = scmp.eq.s32.totalorder %s37, 1
      %p387 = por %p385, %p386
      %p388 = scmp.ne.s32.totalorder %s379, %s380
      %p389 = scmp.eq.s32.totalorder %s37, 0
      %p390 = por %p388, %p389
      %p391 = scmp.ne.s32.totalorder %s379, %s380
      %p392 = scmp.eq.s32.totalorder %s38, 1
      %p393 = por %p391, %p392
      %p395 = scmp.ne.s32.totalorder %s380, %s394
      %p396 = scmp.eq.s32.totalorder %s38, 0
      %p397 = por %p395, %p396
      %s399 = sadd.s32 %s398, 1
      %p402 = scmp.eq.s32.totalorder %s32, 1
      %p403 = scmp.ne.s32.totalorder %s398, %s400
      %p404 = scmp.eq.s32.totalorder %s32, 0
      %p405 = por %p403, %p404
      %p406 = scmp.ne.s32.totalorder %s398, %s400
      %p407 = scmp.eq.s32.totalorder %s37, 1
      %p408 = por %p406, %p407
      %p409 = scmp.ne.s32.totalorder %s400, %s401
      %p410 = scmp.eq.s32.totalorder %s37, 0
      %p411 = por %p409, %p410
      %p412 = scmp.ne.s32.totalorder %s400, %s401
      %p413 = scmp.eq.s32.totalorder %s38, 1
      %p414 = por %p412, %p413
      %p416 = scmp.ne.s32.totalorder %s401, %s415
      %p417 = scmp.eq.s32.totalorder %s38, 0
      %p418 = por %p416, %p417
      %s420 = sadd.s32 %s419, 1
      %p423 = scmp.eq.s32.totalorder %s32, 1
      %p424 = scmp.ne.s32.totalorder %s419, %s421
      %p425 = scmp.eq.s32.totalorder %s32, 0
      %p426 = por %p424, %p425
      %p427 = scmp.ne.s32.totalorder %s419, %s421
      %p428 = scmp.eq.s32.totalorder %s37, 1
      %p429 = por %p427, %p428
      %p430 = scmp.ne.s32.totalorder %s421, %s422
      %p431 = scmp.eq.s32.totalorder %s37, 0
      %p432 = por %p430, %p431
      %p433 = scmp.ne.s32.totalorder %s421, %s422
      %p434 = scmp.eq.s32.totalorder %s38, 1
      %p435 = por %p433, %p434
      %p437 = scmp.ne.s32.totalorder %s422, %s436
      %p438 = scmp.eq.s32.totalorder %s38, 0
      %p439 = por %p437, %p438
      %s440 = ssub.s32 %s39, %s51
      %s441 = ssub.s32 %s40, %s47
      %s442 = sor.u32 %s440, %s441
      %p443 = scmp.eq.s32.totalorder %s442, 0
      %s445 = sadd.s32 %s444, 1
      %s446 = scalar_select %p443, %s444, %s445
      %p449 = pneg %p443
      %p450 = scmp.eq.s32.totalorder %s32, 1
      %p451 = por %p449, %p450
      %p452 = scmp.ne.s32.totalorder %s444, %s447
      %p453 = scmp.eq.s32.totalorder %s32, 0
      %p454 = por %p452, %p453
      %p455 = scmp.ne.s32.totalorder %s444, %s447
      %p456 = scmp.eq.s32.totalorder %s37, 1
      %p457 = por %p455, %p456
      %p458 = scmp.ne.s32.totalorder %s447, %s448
      %p459 = scmp.eq.s32.totalorder %s37, 0
      %p460 = por %p458, %p459
      %p461 = scmp.ne.s32.totalorder %s447, %s448
      %p462 = scmp.eq.s32.totalorder %s38, 1
      %p463 = por %p461, %p462
      %p465 = scmp.ne.s32.totalorder %s448, %s464
      %p466 = scmp.eq.s32.totalorder %s38, 0
      %p467 = por %p465, %p466
      %p468 = scmp.le.s32.totalorder 1, %s32
      %p469 = scmp.lt.s32.totalorder %s32, 3
      %p470 = pnand %p468, %p469
      %p471 = pneg %p470
      // Predicated region
      $region9: #{tpu_custom_call.1} parent=5 // pred_check
        _
      $region10: #{tpu_custom_call.1} parent=5 // pred_check_branch
        %473 = sbr.rel (%p470) target = $region12
      $region11: #{tpu_custom_call.1} parent=5 // pred_region
        %s474 = ssub.s32 %s32, 1
        // Predicated region
        $region13: #{tpu_custom_call.1} parent=11 // pred_check
          %p475 = pneg %p117
        $region14: #{tpu_custom_call.1} parent=11 // pred_check_branch
          %477 = sbr.rel (%p475) target = $region16
        $region15: #{tpu_custom_call.1} parent=11 // pred_region
          _
        $region16: #{tpu_custom_call.1} parent=11 // pred_fallthru
          _
        // Predicated region
        $region17: #{tpu_custom_call.1} parent=11 // pred_check
          %p478 = pneg %p138
        $region18: #{tpu_custom_call.1} parent=11 // pred_check_branch
          %480 = sbr.rel (%p478) target = $region20
        $region19: #{tpu_custom_call.1} parent=11 // pred_region
          _
        $region20: #{tpu_custom_call.1} parent=11 // pred_fallthru
          _
        // Predicated region
        $region21: #{tpu_custom_call.1} parent=11 // pred_check
          %p481 = pneg %p159
        $region22: #{tpu_custom_call.1} parent=11 // pred_check_branch
          %483 = sbr.rel (%p481) target = $region24
        $region23: #{tpu_custom_call.1} parent=11 // pred_region
          _
        $region24: #{tpu_custom_call.1} parent=11 // pred_fallthru
          _
        // Predicated region
        $region25: #{tpu_custom_call.1} parent=11 // pred_check
          %p484 = pneg %p180
        $region26: #{tpu_custom_call.1} parent=11 // pred_check_branch
          %486 = sbr.rel (%p484) target = $region28
        $region27: #{tpu_custom_call.1} parent=11 // pred_region
          _
        $region28: #{tpu_custom_call.1} parent=11 // pred_fallthru
          _
        // Predicated region
        $region29: #{tpu_custom_call.1} parent=11 // pred_check
          %p487 = pneg %p201
        $region30: #{tpu_custom_call.1} parent=11 // pred_check_branch
          %489 = sbr.rel (%p487) target = $region32
        $region31: #{tpu_custom_call.1} parent=11 // pred_region
          %491 = vsyncadd [#allocation8], 0
          %s492 = sshll.u32 %s6, 4
          %s493 = int_to_ptr.hbm [resolvable:$true] %s492
          %s494 = sshll.u32 [#allocation7], 4
          %s495 = int_to_ptr.vmem [resolvable:$true] %s494
          %500 = dma.hbm_to_vmem [thread:$0]  %s493, 256, %s495, [#allocation8], 64, 64, 4
        $region32: #{tpu_custom_call.1} parent=11 // pred_fallthru
          _
        // Predicated region
        $region33: #{tpu_custom_call.1} parent=11 // pred_check
          %p501 = pneg %p222
        $region34: #{tpu_custom_call.1} parent=11 // pred_check_branch
          %503 = sbr.rel (%p501) target = $region36
        $region35: #{tpu_custom_call.1} parent=11 // pred_region
          _
        $region36: #{tpu_custom_call.1} parent=11 // pred_fallthru
          _
        // Predicated region
        $region37: #{tpu_custom_call.1} parent=11 // pred_check
          %p504 = pneg %p243
        $region38: #{tpu_custom_call.1} parent=11 // pred_check_branch
          %506 = sbr.rel (%p504) target = $region40
        $region39: #{tpu_custom_call.1} parent=11 // pred_region
          %508 = vsyncadd [#allocation8], 0
          %s509 = sshll.u32 %s8, 4
          %s510 = int_to_ptr.hbm [resolvable:$true] %s509
          %s511 = sshll.u32 [#allocation9], 4
          %s512 = int_to_ptr.vmem [resolvable:$true] %s511
          %517 = dma.hbm_to_vmem [thread:$0]  %s510, 256, %s512, [#allocation8], 64, 64, 4
        $region40: #{tpu_custom_call.1} parent=11 // pred_fallthru
          _
        // Predicated region
        $region41: #{tpu_custom_call.1} parent=11 // pred_check
          %p518 = pneg %p264
        $region42: #{tpu_custom_call.1} parent=11 // pred_check_branch
          %520 = sbr.rel (%p518) target = $region44
        $region43: #{tpu_custom_call.1} parent=11 // pred_region
          _
        $region44: #{tpu_custom_call.1} parent=11 // pred_fallthru
          _
        // Predicated region
        $region45: #{tpu_custom_call.1} parent=11 // pred_check
          %p521 = pneg %p285
        $region46: #{tpu_custom_call.1} parent=11 // pred_check_branch
          %523 = sbr.rel (%p521) target = $region48
        $region47: #{tpu_custom_call.1} parent=11 // pred_region
          _
        $region48: #{tpu_custom_call.1} parent=11 // pred_fallthru
          _
        // Predicated region
        $region49: #{tpu_custom_call.1} parent=11 // pred_check
          %p524 = pneg %p306
        $region50: #{tpu_custom_call.1} parent=11 // pred_check_branch
          %526 = sbr.rel (%p524) target = $region52
        $region51: #{tpu_custom_call.1} parent=11 // pred_region
          _
        $region52: #{tpu_custom_call.1} parent=11 // pred_fallthru
          _
        // Predicated region
        $region53: #{tpu_custom_call.1} parent=11 // pred_check
          %p527 = pneg %p327
        $region54: #{tpu_custom_call.1} parent=11 // pred_check_branch
          %529 = sbr.rel (%p527) target = $region56
        $region55: #{tpu_custom_call.1} parent=11 // pred_region
          %531 = vsyncadd [#allocation11], 0
          %s532 = sshll.u32 %s12, 4
          %s533 = int_to_ptr.hbm [resolvable:$true] %s532
          %s534 = sshll.u32 [#allocation10], 4
          %s535 = int_to_ptr.vmem [resolvable:$true] %s534
          %540 = dma.hbm_to_vmem [thread:$0]  %s533, 256, %s535, [#allocation11], 64, 64, 4
        $region56: #{tpu_custom_call.1} parent=11 // pred_fallthru
          _
        // Predicated region
        $region57: #{tpu_custom_call.1} parent=11 // pred_check
          %p541 = pneg %p348
        $region58: #{tpu_custom_call.1} parent=11 // pred_check_branch
          %543 = sbr.rel (%p541) target = $region60
        $region59: #{tpu_custom_call.1} parent=11 // pred_region
          _
        $region60: #{tpu_custom_call.1} parent=11 // pred_fallthru
          _
        // Predicated region
        $region61: #{tpu_custom_call.1} parent=11 // pred_check
          %p544 = pneg %p369
        $region62: #{tpu_custom_call.1} parent=11 // pred_check_branch
          %546 = sbr.rel (%p544) target = $region64
        $region63: #{tpu_custom_call.1} parent=11 // pred_region
          _
        $region64: #{tpu_custom_call.1} parent=11 // pred_fallthru
          _
        // Predicated region
        $region65: #{tpu_custom_call.1} parent=11 // pred_check
          %p547 = pneg %p390
        $region66: #{tpu_custom_call.1} parent=11 // pred_check_branch
          %549 = sbr.rel (%p547) target = $region68
        $region67: #{tpu_custom_call.1} parent=11 // pred_region
          _
        $region68: #{tpu_custom_call.1} parent=11 // pred_fallthru
          _
        // Predicated region
        $region69: #{tpu_custom_call.1} parent=11 // pred_check
          %p550 = pneg %p411
        $region70: #{tpu_custom_call.1} parent=11 // pred_check_branch
          %552 = sbr.rel (%p550) target = $region72
        $region71: #{tpu_custom_call.1} parent=11 // pred_region
          _
        $region72: #{tpu_custom_call.1} parent=11 // pred_fallthru
          _
        // Predicated region
        $region73: #{tpu_custom_call.1} parent=11 // pred_check
          %p553 = pneg %p432
        $region74: #{tpu_custom_call.1} parent=11 // pred_check_branch
          %555 = sbr.rel (%p553) target = $region76
        $region75: #{tpu_custom_call.1} parent=11 // pred_region
          _
        $region76: #{tpu_custom_call.1} parent=11 // pred_fallthru
          _
      $region12: #{tpu_custom_call.1} parent=5 // pred_fallthru
        _
      %p556 = scmp.lt.s32.totalorder %s32, 2
      // Predicated region
      $region77: #{tpu_custom_call.1} parent=5 // pred_check
        %p557 = pneg %p556
      $region78: #{tpu_custom_call.1} parent=5 // pred_check_branch
        %559 = sbr.rel (%p557) target = $region80
      $region79: #{tpu_custom_call.1} parent=5 // pred_region
        // Predicated region
        $region81: #{tpu_custom_call.1} parent=79 // pred_check
          %p560 = pneg %p64
        $region82: #{tpu_custom_call.1} parent=79 // pred_check_branch
          %562 = sbr.rel (%p560) target = $region84
        $region83: #{tpu_custom_call.1} parent=79 // pred_region
          %p563 = scmp.lt.s32.totalorder %s39, 1
          %s564 = scalar_select %p563, %s39, 1
          %s565 = smul.addr %s564, 8
          %s566 = scalar_lea.vmem %s0, %s565
        $region84: #{tpu_custom_call.1} parent=79 // pred_fallthru
          _
        // Predicated region
        $region85: #{tpu_custom_call.1} parent=79 // pred_check
          %p567 = pneg %p90
        $region86: #{tpu_custom_call.1} parent=79 // pred_check_branch
          %569 = sbr.rel (%p567) target = $region88
        $region87: #{tpu_custom_call.1} parent=79 // pred_region
          %s570 = sand.u32 %s80, 1
          %s571 = scalar_lea.sflag [#allocation5], %s570
          %s572 = sand.u32 %s80, 1
          %s573 = scalar_lea.vmem [#allocation4], %s572
          %575 = vsyncadd %s571, 0
          %s576 = scalar_lea.hbm %s1, %s39
          %s578 = sshll.u32 %s576, 4
          %s579 = int_to_ptr.hbm [resolvable:$true] %s578
          %s580 = sshll.u32 %s573, 4
          %s581 = int_to_ptr.vmem [resolvable:$true] %s580
          %583 = dma.hbm_to_vmem [thread:$0]  %s579, 16, %s581, %s571
        $region88: #{tpu_custom_call.1} parent=79 // pred_fallthru
          _
      $region80: #{tpu_custom_call.1} parent=5 // pred_fallthru
        _
      %p584 = scmp.le.s32.totalorder 1, %s32
      %p585 = scmp.lt.s32.totalorder %s32, 3
      %p586 = pnand %p584, %p585
      %p587 = pneg %p586
      // Predicated region
      $region89: #{tpu_custom_call.1} parent=5 // pred_check
        _
      $region90: #{tpu_custom_call.1} parent=5 // pred_check_branch
        %589 = sbr.rel (%p586) target = $region92
      $region91: #{tpu_custom_call.1} parent=5 // pred_region
        %s590 = ssub.s32 %s32, 1
        %s591 = sand.u32 %s83, 1
        %s592 = scalar_lea.sflag [#allocation5], %s591
        %s593 = sand.u32 %s83, 1
        %s594 = scalar_lea.vmem [#allocation4], %s593
        // Predicated region
        $region93: #{tpu_custom_call.1} parent=91 // pred_check
          %p595 = pneg %p96
        $region94: #{tpu_custom_call.1} parent=91 // pred_check_branch
          %597 = sbr.rel (%p595) target = $region96
        $region95: #{tpu_custom_call.1} parent=91 // pred_region
          %599 = dma.done %s592, 16
        $region96: #{tpu_custom_call.1} parent=91 // pred_fallthru
          _
        // Predicated region
        $region97: #{tpu_custom_call.1} parent=91 // pred_check
          %p600 = pneg %p201
        $region98: #{tpu_custom_call.1} parent=91 // pred_check_branch
          %602 = sbr.rel (%p600) target = $region100
        $region99: #{tpu_custom_call.1} parent=91 // pred_region
          %604 = dma.done [#allocation8], 256
        $region100: #{tpu_custom_call.1} parent=91 // pred_fallthru
          _
        // Predicated region
        $region101: #{tpu_custom_call.1} parent=91 // pred_check
          %p605 = pneg %p243
        $region102: #{tpu_custom_call.1} parent=91 // pred_check_branch
          %607 = sbr.rel (%p605) target = $region104
        $region103: #{tpu_custom_call.1} parent=91 // pred_region
          %609 = dma.done [#allocation8], 256
        $region104: #{tpu_custom_call.1} parent=91 // pred_fallthru
          _
        // Predicated region
        $region105: #{tpu_custom_call.1} parent=91 // pred_check
          %p610 = pneg %p327
        $region106: #{tpu_custom_call.1} parent=91 // pred_check_branch
          %612 = sbr.rel (%p610) target = $region108
        $region107: #{tpu_custom_call.1} parent=91 // pred_region
          %614 = dma.done [#allocation11], 256
        $region108: #{tpu_custom_call.1} parent=91 // pred_fallthru
          _
        %p615 = scmp.lt.s32.totalorder %s41, 1
        %s616 = scalar_select %p615, %s41, 1
        %s617 = smul.addr %s616, 8
        %s618 = scalar_lea.vmem %s0, %s617
        %p619 = pneg %p70
        %p620 = pneg %p67
        %s621 = sand.u32 %s83, 1
        %s622 = scalar_lea.sflag [#allocation5], %s621
        %s623 = sand.u32 %s83, 1
        %s624 = scalar_lea.vmem [#allocation4], %s623
        %p625 = pneg %p96
        %p626 = pneg %p93
        %p627 = pneg %p117
        %p628 = pneg %p114
        %p629 = pneg %p138
        %p630 = pneg %p135
        %p631 = pneg %p159
        %p632 = pneg %p156
        %p633 = pneg %p180
        %p634 = pneg %p177
        %p635 = pneg %p201
        %p636 = pneg %p198
        %p637 = pneg %p222
        %p638 = pneg %p219
        %p639 = pneg %p243
        %p640 = pneg %p240
        %p641 = pneg %p264
        %p642 = pneg %p261
        %p643 = pneg %p285
        %p644 = pneg %p282
        %p645 = pneg %p306
        %p646 = pneg %p303
        %p647 = pneg %p327
        %p648 = pneg %p324
        %p649 = pneg %p348
        %p650 = pneg %p345
        %p651 = pneg %p369
        %p652 = pneg %p366
        %p653 = pneg %p390
        %p654 = pneg %p387
        %p655 = pneg %p411
        %p656 = pneg %p408
        %p657 = pneg %p432
        %p658 = pneg %p429
        %p659 = pneg %p460
        %p660 = pneg %p457
        %s661 = sand.u32 %s447, 1
        %s662 = scalar_lea.sflag [#allocation6], %s661
        %s663 = sand.u32 %s447, 1
        %s664 = smul.addr %s663, 8
        %s665 = scalar_lea.vmem [#allocation12], %s664
        %p666 = scmp.lt.s32.totalorder %s41, 1
        %s667 = scalar_select %p666, %s41, 1
        %s668 = smul.addr %s667, 8
        %s669 = scalar_lea.vmem %s0, %s668
        %p671 = scmp.eq.s32.totalorder %s42, 0
        // Predicated region
        $region109: #{tpu_custom_call.1} parent=91 // pred_check
          %p672 = pneg %p671
        $region110: #{tpu_custom_call.1} parent=91 // pred_check_branch
          %674 = sbr.rel (%p672) target = $region112
        $region111: #{tpu_custom_call.1} parent=91 // pred_region
          %v675 = vld [vmem:[%s669] sm:$0xff]
          %v676 = vpack.c.bf16 %v675, %v675
          %v677 = vld [vmem:[%s4] sm:$0xf]
          %v678 = vld [vmem:[%s4 + $0x4] sm:$0xf]
          %v679 = vld [vmem:[%s4 + $0x8] sm:$0xf]
          %v680 = vld [vmem:[%s4 + $0xc] sm:$0xf]
          %v681 = vld [vmem:[%s5] sm:$0x1]
          %v683 = vperm.slane %v681, 0
          %v689 = vunpack.c.l.b16 %v677
          %v690 = vunpack.c.l.b16 %v678
          %v691 = vunpack.c.l.b16 %v679
          %v692 = vunpack.c.l.b16 %v680
          %v693 = vpack.c.b16 %v690, %v689
          %v694 = vpack.c.b16 %v692, %v691
          %vm697 = vcmask 261120
          %v699 = vsel %vm697, %v676, 0
          %701 = vmatpush.bf16.msra.mxu0 0
          %702 = vmatpush.bf16.msra.mxu0 0
          %703 = vmatpush.bf16.msra.mxu0 0
          %704 = vmatpush.bf16.msra.mxu0 0
          %705 = vmatpush.bf16.msra.mxu0 0
          %706 = vmatpush.bf16.msra.mxu0 0
          %707 = vmatpush.bf16.msra.mxu0 %v694
          %708 = vmatpush.bf16.msra.mxu0 %v693
          %709 = vmatmul.bf16.gmra.mxu0 %v699
          %v710 = vpop.f32.mrf.mxu0
          %v711 = vadd.f32 %v683, %v710
          %v712 = vpop.f32.mrf.mxu0
          %713 = vdwg.mxu0
          %v714 = vld [vmem:[#allocation7] sm:$0xf]
          %v715 = vld [vmem:[#allocation7 + $0x4] sm:$0xf]
          %v716 = vld [vmem:[#allocation7 + $0x8] sm:$0xf]
          %v717 = vld [vmem:[#allocation7 + $0xc] sm:$0xf]
          %v718 = vld [vmem:[%s7] sm:$0x1]
          %v720 = vperm.slane %v718, 0
          %v726 = vunpack.c.l.b16 %v714
          %v727 = vunpack.c.l.b16 %v715
          %v728 = vunpack.c.l.b16 %v716
          %v729 = vunpack.c.l.b16 %v717
          %v730 = vpack.c.b16 %v727, %v726
          %v731 = vpack.c.b16 %v729, %v728
          %734 = vmatpush.bf16.msra.mxu0 0
          %735 = vmatpush.bf16.msra.mxu0 0
          %736 = vmatpush.bf16.msra.mxu0 0
          %737 = vmatpush.bf16.msra.mxu0 0
          %738 = vmatpush.bf16.msra.mxu0 0
          %739 = vmatpush.bf16.msra.mxu0 0
          %740 = vmatpush.bf16.msra.mxu0 %v731
          %741 = vmatpush.bf16.msra.mxu0 %v730
          %742 = vmatmul.bf16.gmra.mxu0 %v699
          %v743 = vpop.f32.mrf.mxu0
          %v744 = vadd.f32 %v720, %v743
          %v745 = vpop.f32.mrf.mxu0
          %746 = vdwg.mxu0
          %v747 = vpack.c.bf16 %v711, %v711
          %vm748 = vcmask 60416
          %749 = vst.msk [vmem:[#allocation2] sm:$0xf] %vm748, %v747
          %v750 = vpack.c.bf16 %v744, %v744
          %751 = vst.msk [vmem:[#allocation3] sm:$0xf] %vm748, %v750
          %753 = vrot.lane.b32.xlu0 %v747, 120
          %v754 = vpop.permute.xlu0 %753
          %s756 = scalar_lea.vmem [#allocation2], 4
          %757 = vst.msk [vmem:[%s756] sm:$0xf] %vm748, %v754
          %759 = vrot.lane.b32.xlu0 %v750, 120
          %v760 = vpop.permute.xlu0 %759
          %s762 = scalar_lea.vmem [#allocation3], 4
          %763 = vst.msk [vmem:[%s762] sm:$0xf] %vm748, %v760
          %764 = vrot.lane.b32.xlu0 %v747, 112
          %v765 = vpop.permute.xlu0 %764
          %s767 = scalar_lea.vmem [#allocation2], 8
          %768 = vst.msk [vmem:[%s767] sm:$0xf] %vm748, %v765
          %769 = vrot.lane.b32.xlu0 %v750, 112
          %v770 = vpop.permute.xlu0 %769
          %s772 = scalar_lea.vmem [#allocation3], 8
          %773 = vst.msk [vmem:[%s772] sm:$0xf] %vm748, %v770
          %774 = vrot.lane.b32.xlu0 %v747, 104
          %v775 = vpop.permute.xlu0 %774
          %s777 = scalar_lea.vmem [#allocation2], 12
          %778 = vst.msk [vmem:[%s777] sm:$0xf] %vm748, %v775
          %779 = vrot.lane.b32.xlu0 %v750, 104
          %v780 = vpop.permute.xlu0 %779
          %s782 = scalar_lea.vmem [#allocation3], 12
          %783 = vst.msk [vmem:[%s782] sm:$0xf] %vm748, %v780
        $region112: #{tpu_custom_call.1} parent=91 // pred_fallthru
          _
        %s784 = smul.u32 %s42, 8
        %s785 = scalar_lea.vmem %s669, %s784
        %v786 = vld [vmem:[%s785] sm:$0xff]
        %v787 = vld [vmem:[%s594] sm:$0x1]
        %v788 = vpack.c.bf16 %v786, %v786
        %v789 = vld [vmem:[%s2] sm:$0xf]
        %v790 = vld [vmem:[%s2 + $0x4] sm:$0xf]
        %v791 = vld [vmem:[%s2 + $0x8] sm:$0xf]
        %v792 = vld [vmem:[%s2 + $0xc] sm:$0xf]
        %v793 = vld [vmem:[%s3] sm:$0x1]
        %v795 = vperm.slane %v793, 0
        %v801 = vunpack.c.l.b16 %v789
        %v802 = vunpack.c.l.b16 %v790
        %v803 = vunpack.c.l.b16 %v791
        %v804 = vunpack.c.l.b16 %v792
        %v805 = vpack.c.b16 %v802, %v801
        %v806 = vpack.c.b16 %v804, %v803
        %vm809 = vcmask 261120
        %v811 = vsel %vm809, %v788, 0
        %813 = vmatpush.bf16.msra.mxu0 0
        %814 = vmatpush.bf16.msra.mxu0 0
        %815 = vmatpush.bf16.msra.mxu0 0
        %816 = vmatpush.bf16.msra.mxu0 0
        %817 = vmatpush.bf16.msra.mxu0 0
        %818 = vmatpush.bf16.msra.mxu0 0
        %819 = vmatpush.bf16.msra.mxu0 %v806
        %820 = vmatpush.bf16.msra.mxu0 %v805
        %821 = vmatmul.bf16.gmra.mxu0 %v811
        %v822 = vpop.f32.mrf.mxu0
        %v823 = vadd.f32 %v795, %v822
        %v824 = vpop.f32.mrf.mxu0
        %825 = vdwg.mxu0
        %827 = vrot.lane.b32.xlu0 %v823, 120
        %v828 = vpop.permute.xlu0 %827
        %830 = vrot.lane.b32.xlu0 %v823, 112
        %v831 = vpop.permute.xlu0 %830
        %833 = vrot.lane.b32.xlu0 %v823, 104
        %v834 = vpop.permute.xlu0 %833
        %v836 = vpack.c.bf16 %v823, %v823
        %v837 = vpack.c.bf16 %v828, %v828
        %v838 = vpack.c.bf16 %v831, %v831
        %v839 = vpack.c.bf16 %v834, %v834
        %v840 = vld [vmem:[#allocation2] sm:$0xf]
        %v841 = vld [vmem:[#allocation2 + $0x4] sm:$0xf]
        %v842 = vld [vmem:[#allocation2 + $0x8] sm:$0xf]
        %v843 = vld [vmem:[#allocation2 + $0xc] sm:$0xf]
        %v845 = vperm.slane %v787, 0
        %vm847 = vcmask 64512
        %v849 = vsel %vm847, %v836, 0
        %v852 = vsel %vm847, %v840, 0
        %854 = vmatpush.bf16.xpose.msra.mxu0 0
        %855 = vmatpush.bf16.xpose.msra.mxu0 0
        %856 = vmatpush.bf16.xpose.msra.mxu0 0
        %857 = vmatpush.bf16.xpose.msra.mxu0 0
        %858 = vmatpush.bf16.xpose.msra.mxu0 0
        %859 = vmatpush.bf16.xpose.msra.mxu0 0
        %860 = vmatpush.bf16.xpose.msra.mxu0 0
        %861 = vmatpush.bf16.xpose.msra.mxu0 %v852
        %862 = vmatmul.bf16.gmra.mxu0 %v849
        %v863 = vpop.f32.mrf.mxu0
        %v864 = vadd.f32 %v845, %v863
        %v865 = vpop.f32.mrf.mxu0
        %866 = vdwg.mxu0
        %v868 = vsel %vm847, %v837, 0
        %v871 = vsel %vm847, %v841, 0
        %873 = vmatpush.bf16.xpose.msra.mxu0 0
        %874 = vmatpush.bf16.xpose.msra.mxu0 0
        %875 = vmatpush.bf16.xpose.msra.mxu0 0
        %876 = vmatpush.bf16.xpose.msra.mxu0 0
        %877 = vmatpush.bf16.xpose.msra.mxu0 0
        %878 = vmatpush.bf16.xpose.msra.mxu0 0
        %879 = vmatpush.bf16.xpose.msra.mxu0 0
        %880 = vmatpush.bf16.xpose.msra.mxu0 %v871
        %881 = vmatmul.bf16.gmra.mxu0 %v868
        %v882 = vpop.f32.mrf.mxu0
        %v883 = vadd.f32 %v845, %v882
        %v884 = vpop.f32.mrf.mxu0
        %885 = vdwg.mxu0
        %v887 = vsel %vm847, %v838, 0
        %v890 = vsel %vm847, %v842, 0
        %892 = vmatpush.bf16.xpose.msra.mxu0 0
        %893 = vmatpush.bf16.xpose.msra.mxu0 0
        %894 = vmatpush.bf16.xpose.msra.mxu0 0
        %895 = vmatpush.bf16.xpose.msra.mxu0 0
        %896 = vmatpush.bf16.xpose.msra.mxu0 0
        %897 = vmatpush.bf16.xpose.msra.mxu0 0
        %898 = vmatpush.bf16.xpose.msra.mxu0 0
        %899 = vmatpush.bf16.xpose.msra.mxu0 %v890
        %900 = vmatmul.bf16.gmra.mxu0 %v887
        %v901 = vpop.f32.mrf.mxu0
        %v902 = vadd.f32 %v845, %v901
        %v903 = vpop.f32.mrf.mxu0
        %904 = vdwg.mxu0
        %v906 = vsel %vm847, %v839, 0
        %v909 = vsel %vm847, %v843, 0
        %911 = vmatpush.bf16.xpose.msra.mxu0 0
        %912 = vmatpush.bf16.xpose.msra.mxu0 0
        %913 = vmatpush.bf16.xpose.msra.mxu0 0
        %914 = vmatpush.bf16.xpose.msra.mxu0 0
        %915 = vmatpush.bf16.xpose.msra.mxu0 0
        %916 = vmatpush.bf16.xpose.msra.mxu0 0
        %917 = vmatpush.bf16.xpose.msra.mxu0 0
        %918 = vmatpush.bf16.xpose.msra.mxu0 %v909
        %919 = vmatmul.bf16.gmra.mxu0 %v906
        %v920 = vpop.f32.mrf.mxu0
        %v921 = vadd.f32 %v845, %v920
        %v922 = vpop.f32.mrf.mxu0
        %923 = vdwg.mxu0
        %v924 = vsel %vm847, %v864, -inf
        %925 = vmax.xlane.f32.xlu0 %v924
        %v926 = vpop.xlane.xlu0 %925
        %v927 = vsel %vm847, %v883, -inf
        %928 = vmax.xlane.f32.xlu0 %v927
        %v929 = vpop.xlane.xlu0 %928
        %v930 = vsel %vm847, %v902, -inf
        %931 = vmax.xlane.f32.xlu0 %v930
        %v932 = vpop.xlane.xlu0 %931
        %v933 = vsel %vm847, %v921, -inf
        %934 = vmax.xlane.f32.xlu0 %v933
        %v935 = vpop.xlane.xlu0 %934
        %v936 = vsub.f32 %v864, %v926
        %v937 = vsub.f32 %v883, %v929
        %v938 = vsub.f32 %v902, %v932
        %v939 = vsub.f32 %v921, %v935
        %v940 = vmul.f32 %v936, 1.442695
        %v941 = vpow.pop %v940
        %v942 = vmul.f32 %v937, 1.442695
        %v943 = vpow.pop %v942
        %v944 = vmul.f32 %v938, 1.442695
        %v945 = vpow.pop %v944
        %v946 = vmul.f32 %v939, 1.442695
        %v947 = vpow.pop %v946
        %v948 = vsel %vm847, %v941, 0.0
        %949 = vadd.xlane.f32.xlu0 %v948
        %v950 = vpop.xlane.xlu0 %949
        %v951 = vsel %vm847, %v943, 0.0
        %952 = vadd.xlane.f32.xlu0 %v951
        %v953 = vpop.xlane.xlu0 %952
        %v954 = vsel %vm847, %v945, 0.0
        %955 = vadd.xlane.f32.xlu0 %v954
        %v956 = vpop.xlane.xlu0 %955
        %v957 = vsel %vm847, %v947, 0.0
        %958 = vadd.xlane.f32.xlu0 %v957
        %v959 = vpop.xlane.xlu0 %958
        %v960 = vrcp.pop %v950
        %v961 = vrcp.pop %v953
        %v962 = vrcp.pop %v956
        %v963 = vrcp.pop %v959
        %v964 = vmul.f32 %v941, %v960
        %v965 = vmul.f32 %v943, %v961
        %v966 = vmul.f32 %v945, %v962
        %v967 = vmul.f32 %v947, %v963
        %v968 = vpack.c.bf16 %v964, %v964
        %v969 = vpack.c.bf16 %v965, %v965
        %v970 = vpack.c.bf16 %v966, %v966
        %v971 = vpack.c.bf16 %v967, %v967
        %v972 = vld [vmem:[#allocation3] sm:$0xf]
        %v973 = vld [vmem:[#allocation3 + $0x4] sm:$0xf]
        %v974 = vld [vmem:[#allocation3 + $0x8] sm:$0xf]
        %v975 = vld [vmem:[#allocation3 + $0xc] sm:$0xf]
        %v977 = vsel %vm847, %v968, 0
        %vm979 = vcmask 1043456
        %v981 = vsel %vm979, %v972, 0
        %983 = vmatpush.bf16.msra.mxu0 0
        %984 = vmatpush.bf16.msra.mxu0 0
        %985 = vmatpush.bf16.msra.mxu0 0
        %986 = vmatpush.bf16.msra.mxu0 0
        %987 = vmatpush.bf16.msra.mxu0 0
        %988 = vmatpush.bf16.msra.mxu0 0
        %989 = vmatpush.bf16.msra.mxu0 0
        %990 = vmatpush.bf16.msra.mxu0 %v981
        %991 = vmatmul.bf16.gmra.mxu0 %v977
        %v992 = vpop.f32.mrf.mxu0
        %v993 = vadd.f32 0.0, %v992
        %v994 = vpop.f32.mrf.mxu0
        %995 = vdwg.mxu0
        %v997 = vsel %vm847, %v969, 0
        %v1000 = vsel %vm979, %v973, 0
        %1002 = vmatpush.bf16.msra.mxu0 0
        %1003 = vmatpush.bf16.msra.mxu0 0
        %1004 = vmatpush.bf16.msra.mxu0 0
        %1005 = vmatpush.bf16.msra.mxu0 0
        %1006 = vmatpush.bf16.msra.mxu0 0
        %1007 = vmatpush.bf16.msra.mxu0 0
        %1008 = vmatpush.bf16.msra.mxu0 0
        %1009 = vmatpush.bf16.msra.mxu0 %v1000
        %1010 = vmatmul.bf16.gmra.mxu0 %v997
        %v1011 = vpop.f32.mrf.mxu0
        %v1012 = vadd.f32 0.0, %v1011
        %v1013 = vpop.f32.mrf.mxu0
        %1014 = vdwg.mxu0
        %v1016 = vsel %vm847, %v970, 0
        %v1019 = vsel %vm979, %v974, 0
        %1021 = vmatpush.bf16.msra.mxu0 0
        %1022 = vmatpush.bf16.msra.mxu0 0
        %1023 = vmatpush.bf16.msra.mxu0 0
        %1024 = vmatpush.bf16.msra.mxu0 0
        %1025 = vmatpush.bf16.msra.mxu0 0
        %1026 = vmatpush.bf16.msra.mxu0 0
        %1027 = vmatpush.bf16.msra.mxu0 0
        %1028 = vmatpush.bf16.msra.mxu0 %v1019
        %1029 = vmatmul.bf16.gmra.mxu0 %v1016
        %v1030 = vpop.f32.mrf.mxu0
        %v1031 = vadd.f32 0.0, %v1030
        %v1032 = vpop.f32.mrf.mxu0
        %1033 = vdwg.mxu0
        %v1035 = vsel %vm847, %v971, 0
        %v1038 = vsel %vm979, %v975, 0
        %1040 = vmatpush.bf16.msra.mxu0 0
        %1041 = vmatpush.bf16.msra.mxu0 0
        %1042 = vmatpush.bf16.msra.mxu0 0
        %1043 = vmatpush.bf16.msra.mxu0 0
        %1044 = vmatpush.bf16.msra.mxu0 0
        %1045 = vmatpush.bf16.msra.mxu0 0
        %1046 = vmatpush.bf16.msra.mxu0 0
        %1047 = vmatpush.bf16.msra.mxu0 %v1038
        %1048 = vmatmul.bf16.gmra.mxu0 %v1035
        %v1049 = vpop.f32.mrf.mxu0
        %v1050 = vadd.f32 0.0, %v1049
        %v1051 = vpop.f32.mrf.mxu0
        %1052 = vdwg.mxu0
        %1054 = vrot.lane.b32.xlu0 %v1012, 8
        %v1055 = vpop.permute.xlu0 %1054
        %1058 = vrot.lane.b32.xlu0 %v1031, 16
        %v1059 = vpop.permute.xlu0 %1058
        %1062 = vrot.lane.b32.xlu0 %v1050, 24
        %v1063 = vpop.permute.xlu0 %1062
        %v1065 = vsel %vm847, %v993, %v1055
        %vm1066 = vcmask 130048
        %v1067 = vsel %vm1066, %v1065, %v1059
        %vm1068 = vcmask 195584
        %v1069 = vsel %vm1068, %v1067, %v1063
        %v1070 = vpack.c.bf16 %v1069, %v1069
        %v1071 = vld [vmem:[#allocation9] sm:$0xf]
        %v1072 = vld [vmem:[#allocation9 + $0x4] sm:$0xf]
        %v1073 = vld [vmem:[#allocation9 + $0x8] sm:$0xf]
        %v1074 = vld [vmem:[#allocation9 + $0xc] sm:$0xf]
        %v1075 = vld [vmem:[%s9] sm:$0x1]
        %v1077 = vperm.slane %v1075, 0
        %v1083 = vunpack.c.l.b16 %v1071
        %v1084 = vunpack.c.l.b16 %v1072
        %v1085 = vunpack.c.l.b16 %v1073
        %v1086 = vunpack.c.l.b16 %v1074
        %v1087 = vpack.c.b16 %v1084, %v1083
        %v1088 = vpack.c.b16 %v1086, %v1085
        %v1092 = vsel %vm809, %v1070, 0
        %1094 = vmatpush.bf16.msra.mxu0 0
        %1095 = vmatpush.bf16.msra.mxu0 0
        %1096 = vmatpush.bf16.msra.mxu0 0
        %1097 = vmatpush.bf16.msra.mxu0 0
        %1098 = vmatpush.bf16.msra.mxu0 0
        %1099 = vmatpush.bf16.msra.mxu0 0
        %1100 = vmatpush.bf16.msra.mxu0 %v1088
        %1101 = vmatpush.bf16.msra.mxu0 %v1087
        %1102 = vmatmul.bf16.gmra.mxu0 %v1092
        %v1103 = vpop.f32.mrf.mxu0
        %v1104 = vadd.f32 %v1077, %v1103
        %v1105 = vpop.f32.mrf.mxu0
        %1106 = vdwg.mxu0
        %v1107 = vadd.f32 %v1104, %v786
        %v1108 = vld [vmem:[%s10] sm:$0x1]
        %v1109 = vld [vmem:[%s11] sm:$0x1]
        %v1110 = vsel %vm809, %v1107, 0.0
        %1111 = vadd.xlane.f32.xlu0 %v1110
        %v1112 = vpop.xlane.xlu0 %1111
        %v1113 = vrcp.pop 32.0
        %v1114 = vmul.f32 32.0, %v1113
        %v1115 = vsub.f32 1.0, %v1114
        %v1116 = vmul.f32 %v1113, %v1115
        %v1117 = vadd.f32 %v1113, %v1116
        %vm1118 = vweird.f32 %v1113
        %v1119 = vsel %vm1118, %v1113, %v1117
        %v1120 = vmul.f32 %v1112, %v1119
        %v1121 = vsub.f32 %v1107, %v1120
        %v1122 = vmul.f32 %v1121, %v1121
        %v1123 = vsel %vm809, %v1122, 0.0
        %1124 = vadd.xlane.f32.xlu0 %v1123
        %v1125 = vpop.xlane.xlu0 %1124
        %v1126 = vmul.f32 %v1125, %v1119
        %v1127 = vadd.f32 %v1126, 1e-12
        %v1128 = vrsqrt.pop %v1127
        %v1129 = vmul.f32 %v1128, %v1127
        %v1130 = vmul.f32 %v1129, %v1128
        %v1131 = vmul.f32 0.5, %v1130
        %v1132 = vsub.f32 1.5, %v1131
        %v1133 = vmul.f32 %v1128, %v1132
        %vm1134 = vweird.f32 %v1127
        %vm1135 = vweird.f32 %v1128
        %vm1136 = vmor %vm1134, %vm1135
        %v1137 = vsel %vm1136, %v1128, %v1133
        %v1138 = vmul.f32 %v1121, %v1137
        %v1140 = vperm.slane %v1108, 0
        %v1142 = vmul.f32 %v1138, %v1140
        %v1144 = vperm.slane %v1109, 0
        %v1146 = vadd.f32 %v1142, %v1144
        %v1147 = vpack.c.bf16 %v1146, %v1146
        %v1148 = vld [vmem:[#allocation10] sm:$0xf]
        %v1149 = vld [vmem:[#allocation10 + $0x4] sm:$0xf]
        %v1150 = vld [vmem:[#allocation10 + $0x8] sm:$0xf]
        %v1151 = vld [vmem:[#allocation10 + $0xc] sm:$0xf]
        %v1152 = vld [vmem:[%s13] sm:$0x1]
        %v1154 = vperm.slane %v1152, 0
        %v1160 = vunpack.c.l.b16 %v1148
        %v1161 = vunpack.c.l.b16 %v1149
        %v1162 = vunpack.c.l.b16 %v1150
        %v1163 = vunpack.c.l.b16 %v1151
        %v1164 = vpack.c.b16 %v1161, %v1160
        %v1165 = vpack.c.b16 %v1163, %v1162
        %v1169 = vsel %vm809, %v1147, 0
        %1171 = vmatpush.bf16.msra.mxu0 0
        %1172 = vmatpush.bf16.msra.mxu0 0
        %1173 = vmatpush.bf16.msra.mxu0 0
        %1174 = vmatpush.bf16.msra.mxu0 0
        %1175 = vmatpush.bf16.msra.mxu0 0
        %1176 = vmatpush.bf16.msra.mxu0 0
        %1177 = vmatpush.bf16.msra.mxu0 %v1165
        %1178 = vmatpush.bf16.msra.mxu0 %v1164
        %1179 = vmatmul.bf16.gmra.mxu0 %v1169
        %v1180 = vpop.f32.mrf.mxu0
        %v1181 = vadd.f32 %v1154, %v1180
        %v1182 = vpop.f32.mrf.mxu0
        %1183 = vdwg.mxu0
        %v1184 = vmul.f32 %v1181, 0.5
        %v1185 = vmul.f32 %v1181, 0.044715
        %v1186 = vmul.f32 %v1185, %v1181
        %v1187 = vmul.f32 %v1186, %v1181
        %v1188 = vadd.f32 %v1181, %v1187
        %v1189 = vmul.f32 %v1188, 0.7978846
        %v1190 = vtanh.pop %v1189
        %v1191 = vadd.f32 %v1190, 1.0
        %v1192 = vmul.f32 %v1184, %v1191
        %v1193 = vpack.c.bf16 %v1192, %v1192
        %v1194 = vld [vmem:[%s14] sm:$0xf]
        %v1195 = vld [vmem:[%s14 + $0x4] sm:$0xf]
        %v1196 = vld [vmem:[%s14 + $0x8] sm:$0xf]
        %v1197 = vld [vmem:[%s14 + $0xc] sm:$0xf]
        %v1198 = vld [vmem:[%s14 + $0x10] sm:$0xf]
        %v1199 = vld [vmem:[%s14 + $0x14] sm:$0xf]
        %v1200 = vld [vmem:[%s14 + $0x18] sm:$0xf]
        %v1201 = vld [vmem:[%s14 + $0x1c] sm:$0xf]
        %v1202 = vld [vmem:[%s15] sm:$0x1]
        %v1204 = vperm.slane %v1202, 0
        %v1214 = vunpack.c.l.b16 %v1194
        %v1215 = vunpack.c.l.b16 %v1195
        %v1216 = vunpack.c.l.b16 %v1196
        %v1217 = vunpack.c.l.b16 %v1197
        %v1218 = vunpack.c.l.b16 %v1198
        %v1219 = vunpack.c.l.b16 %v1199
        %v1220 = vunpack.c.l.b16 %v1200
        %v1221 = vunpack.c.l.b16 %v1201
        %v1222 = vpack.c.b16 %v1215, %v1214
        %v1223 = vpack.c.b16 %v1217, %v1216
        %v1224 = vpack.c.b16 %v1219, %v1218
        %v1225 = vpack.c.b16 %v1221, %v1220
        %vm1230 = vcmask 523264
        %v1232 = vsel %vm1230, %v1193, 0
        %1234 = vmatpush.bf16.msra.mxu0 0
        %1235 = vmatpush.bf16.msra.mxu0 0
        %1236 = vmatpush.bf16.msra.mxu0 0
        %1237 = vmatpush.bf16.msra.mxu0 0
        %1238 = vmatpush.bf16.msra.mxu0 %v1225
        %1239 = vmatpush.bf16.msra.mxu0 %v1224
        %1240 = vmatpush.bf16.msra.mxu0 %v1223
        %1241 = vmatpush.bf16.msra.mxu0 %v1222
        %1242 = vmatmul.bf16.gmra.mxu0 %v1232
        %v1243 = vpop.f32.mrf.mxu0
        %v1244 = vadd.f32 %v1204, %v1243
        %v1245 = vpop.f32.mrf.mxu0
        %1246 = vdwg.mxu0
        %v1247 = vadd.f32 %v1244, %v1146
        %v1248 = vld [vmem:[%s16] sm:$0x1]
        %v1249 = vld [vmem:[%s17] sm:$0x1]
        %v1250 = vsel %vm809, %v1247, 0.0
        %1251 = vadd.xlane.f32.xlu0 %v1250
        %v1252 = vpop.xlane.xlu0 %1251
        %v1253 = vmul.f32 %v1252, %v1119
        %v1254 = vsub.f32 %v1247, %v1253
        %v1255 = vmul.f32 %v1254, %v1254
        %v1256 = vsel %vm809, %v1255, 0.0
        %1257 = vadd.xlane.f32.xlu0 %v1256
        %v1258 = vpop.xlane.xlu0 %1257
        %v1259 = vmul.f32 %v1258, %v1119
        %v1260 = vadd.f32 %v1259, 1e-12
        %v1261 = vrsqrt.pop %v1260
        %v1262 = vmul.f32 %v1261, %v1260
        %v1263 = vmul.f32 %v1262, %v1261
        %v1264 = vmul.f32 0.5, %v1263
        %v1265 = vsub.f32 1.5, %v1264
        %v1266 = vmul.f32 %v1261, %v1265
        %vm1267 = vweird.f32 %v1260
        %vm1268 = vweird.f32 %v1261
        %vm1269 = vmor %vm1267, %vm1268
        %v1270 = vsel %vm1269, %v1261, %v1266
        %v1271 = vmul.f32 %v1254, %v1270
        %v1273 = vperm.slane %v1248, 0
        %v1275 = vmul.f32 %v1271, %v1273
        %v1277 = vperm.slane %v1249, 0
        %v1279 = vadd.f32 %v1275, %v1277
        %1280 = vst.msk [vmem:[%s665] sm:$0xff] %vm809, %v1279
        %s1281 = sand.u32 %s447, 1
        %s1282 = scalar_lea.sflag [#allocation6], %s1281
        %s1283 = sand.u32 %s447, 1
        %s1284 = smul.addr %s1283, 8
        %s1285 = scalar_lea.vmem [#allocation12], %s1284
        // Predicated region
        $region113: #{tpu_custom_call.1} parent=91 // pred_check
          %p1286 = pneg %p457
        $region114: #{tpu_custom_call.1} parent=91 // pred_check_branch
          %1288 = sbr.rel (%p1286) target = $region116
        $region115: #{tpu_custom_call.1} parent=91 // pred_region
          %1290 = vsyncadd %s1282, 0
          %s1291 = sadd.s32 %s42, %s41
          %s1292 = smul.addr %s1291, 8
          %s1293 = scalar_lea.hbm %s18, %s1292
          %s1295 = sshll.u32 %s1285, 4
          %s1296 = int_to_ptr.vmem [resolvable:$true] %s1295
          %s1297 = sshll.u32 %s1293, 4
          %s1298 = int_to_ptr.hbm [resolvable:$true] %s1297
          %1300 = dma.vmem_to_hbm [thread:$0]  %s1296, 128, %s1298, %s1282
        $region116: #{tpu_custom_call.1} parent=91 // pred_fallthru
          _
      $region92: #{tpu_custom_call.1} parent=5 // pred_fallthru
        _
      %p1301 = scmp.le.s32.totalorder 2, %s32
      // Predicated region
      $region117: #{tpu_custom_call.1} parent=5 // pred_check
        %p1302 = pneg %p1301
      $region118: #{tpu_custom_call.1} parent=5 // pred_check_branch
        %1304 = sbr.rel (%p1302) target = $region120
      $region119: #{tpu_custom_call.1} parent=5 // pred_region
        %s1305 = ssub.s32 %s32, 2
        // Predicated region
        $region121: #{tpu_custom_call.1} parent=119 // pred_check
          %p1306 = pneg %p463
        $region122: #{tpu_custom_call.1} parent=119 // pred_check_branch
          %1308 = sbr.rel (%p1306) target = $region124
        $region123: #{tpu_custom_call.1} parent=119 // pred_region
          %s1309 = sand.u32 %s448, 1
          %s1310 = scalar_lea.sflag [#allocation6], %s1309
          %s1311 = sand.u32 %s448, 1
          %s1312 = smul.addr %s1311, 8
          %s1313 = scalar_lea.vmem [#allocation12], %s1312
          %1315 = dma.done %s1310, 128
        $region124: #{tpu_custom_call.1} parent=119 // pred_fallthru
          _
      $region120: #{tpu_custom_call.1} parent=5 // pred_fallthru
        _
    $region6: #{tpu_custom_call.1} parent=1 // loop_footer
      %s36 = sadd.s32 1, %s32
    $region7: #{tpu_custom_call.1} parent=1 // loop_footer_branch
      %31 = sbr.rel target = $region3
    $region8: #{tpu_custom_call.1} parent=1 // loop_exit
      _
    %1316 = vsyncpa [#allocation5], 1
    %s1317 = scalar_lea.sflag [#allocation5], 1
    %1318 = vsyncpa %s1317, 1
    %1319 = vsyncpa [#allocation8], 1
    %1320 = vsyncpa [#allocation11], 1
    %1321 = vsyncpa [#allocation6], 1
    %s1322 = scalar_lea.sflag [#allocation6], 1
    %1323 = vsyncpa %s1322, 1

</llo_original>
